<compile_context>
chip_gen: v5e
topology: v5e:2x2
jax: 0.10.0
libtpu: 0.0.40
codegen_flags: <defaults>
</compile_context>

<pallas_src>
import functools

import jax
import jax.numpy as jnp
from jax.experimental import pallas as pl
from jax.experimental.pallas import tpu as pltpu

BN_EPS = 1e-5


def _bn_train(v, gamma_b, beta_b, inv_b):
    # BatchNorm1d, training mode, two-pass (numerically robust) variance.
    mean = jnp.sum(v, axis=0, keepdims=True) * inv_b        # (1, F)
    diff = v - mean
    var = jnp.sum(diff * diff, axis=0, keepdims=True) * inv_b
    return gamma_b * diff * jax.lax.rsqrt(var + BN_EPS) + beta_b


def rnn_ae_kernel(x_ref, w_ref, b_ref, out_ref, *, B, T, D, H, cate_groups):
    f32 = jnp.float32
    bf16 = jnp.bfloat16
    DH = D + H

    # ---- unpack the two packed parameter slabs (single loads, sliced) ----
    w = w_ref[...]                                   # (2*D + 3*H, D+H) bf16
    we_x = w[0:D, :H]                                # (D, H)
    we_h = w[D:D + H, :H]                            # (H, H)
    w_big = w[D + H:D + H + DH, :DH]                 # (D+H, H+D) = [[wd_x|wo_x],[wd_h|0]]
    wo_h = w[D + H + DH:D + H + DH + H, :D]          # (H, D)

    bp = b_ref[...]                                  # (7, max(H, D)) f32
    # Hoisted (B, .) broadcasts (no per-iteration broadcast_in_dim).
    ge_b = jnp.broadcast_to(bp[1:2, :H], (B, H))
    bte_b = jnp.broadcast_to(bp[2:3, :H], (B, H))
    bd_b = jnp.broadcast_to(bp[3:4, :H], (B, H))
    gd_b = jnp.broadcast_to(bp[4:5, :H], (B, H))
    btd_b = jnp.broadcast_to(bp[5:6, :H], (B, H))
    bo_b = jnp.broadcast_to(bp[6:7, :D], (B, D))
    inv_b = jnp.float32(1.0 / B)

    # ---------------- encoder ----------------
    # Hoisted input projection: one (T*B, D) @ (D, H) MXU pass, bias folded.
    xh = (jnp.dot(x_ref[...], we_x, preferred_element_type=f32)
          + jnp.broadcast_to(bp[0:1, :H], (T * B, H)))        # (T*B, H) f32

    h = jnp.zeros((B, H), f32)
    for t in range(T):
        pre = (xh[t * B:(t + 1) * B, :]
               + jnp.dot(h.astype(bf16), we_h, preferred_element_type=f32))
        new_h = jnp.tanh(pre)
        h = _bn_train(new_h + h, ge_b, bte_b, inv_b)
    z = h

    # ---- hoisted masks for the one-hot feedback (built from iota only;
    # no captured array constants) ----
    G = len(cate_groups)
    cols_b = jax.lax.broadcasted_iota(jnp.int32, (B, D), 1)
    if G > 0:
        cols_g = jax.lax.broadcasted_iota(jnp.int32, (G * B, D), 1)
        rows_g = jax.lax.broadcasted_iota(jnp.int32, (G * B, D), 0)
        stacked_mask = None
        is_cat = None
        for g, (b0, e0) in enumerate(cate_groups):
            col_in = (cols_g >= b0) & (cols_g < e0)
            row_in = (rows_g >= g * B) & (rows_g < (g + 1) * B)
            m = col_in & row_in
            stacked_mask = m if stacked_mask is None else (stacked_mask | m)
            c = (cols_b >= b0) & (cols_b < e0)
            is_cat = c if is_cat is None else (is_cat | c)
    neg_inf = jnp.float32(-jnp.inf)

    # ---------------- decoder ----------------
    dec_in = jnp.zeros((B, D), f32)
    h = z
    outs = []
    for t in range(T):
        # One K-fused MXU push on the recurrence chain:
        #   [dec_in | h] @ [[wd_x | wo_x], [wd_h | 0]]
        dh = jnp.concatenate([dec_in, h], axis=1).astype(bf16)   # (B, D+H)
        fused = jnp.dot(dh, w_big, preferred_element_type=f32)   # (B, H+D)
        new_h = jnp.tanh(fused[:, :H] + bd_b)
        o = (fused[:, H:]
             + jnp.dot(new_h.astype(bf16), wo_h, preferred_element_type=f32)
             + bo_b)
        h = _bn_train(new_h + h, gd_b, btd_b, inv_b)
        outs.append(o)                                           # f32 (B, D)

        # Feedback input for the next step: torch advanced-indexing
        # "one-hot" (union over batch of per-row first-hit argmax columns).
        # All categorical groups processed at once in a (G*B, D) tile.
        if G > 0:
            o_tiled = jnp.concatenate([o] * G, axis=0)           # (G*B, D)
            masked = jnp.where(stacked_mask, o_tiled, neg_inf)
            maxv = jnp.max(masked, axis=1, keepdims=True)        # (G*B, 1)
            cand = jnp.where(masked == maxv, cols_g, D)          # (G*B, D)
            first = jnp.min(cand, axis=1, keepdims=True)         # (G*B, 1)
            # Groups are lane-disjoint, so one axis-0 max unions both the
            # batch and all groups into a single (1, D) one-hot row.
            hit = jnp.max((cols_g == first).astype(f32), axis=0,
                          keepdims=True)                         # (1, D)
            dec_in = jnp.where(is_cat, jnp.broadcast_to(hit, (B, D)), o)
        else:
            dec_in = o

    # Single lane-dense store: (B, T*D) (exactly 128 lanes at this config).
    out_ref[...] = jnp.concatenate(outs, axis=1)


def rnn_ae_forward(x, params, cate_groups):
    B, T, D = x.shape
    H = params["we_h"].shape[0]
    f32, bf16 = jnp.float32, jnp.bfloat16
    DH = D + H
    Wb = max(H, D)

    # x: (B,T,D) -> bf16 (T*B, D); step t occupies rows [t*B, (t+1)*B).
    # Pre-cast halves the x DMA and avoids in-kernel middle-axis slicing.
    x_tb = jnp.transpose(x, (1, 0, 2)).reshape(T * B, D).astype(bf16)

    # One bf16 weight slab (one DMA): rows = [we_x ; we_h ; W_big ; wo_h],
    # width = H + D.  W_big = [[wd_x | wo_x], [wd_h | 0]].
    def _pad_w(w):
        return jnp.pad(w, ((0, 0), (0, DH - w.shape[1])))
    w_top = jnp.concatenate([params["wd_x"], params["wo_x"]], axis=1)
    w_bot = jnp.concatenate([params["wd_h"], jnp.zeros((H, D), f32)], axis=1)
    w_big = jnp.concatenate([w_top, w_bot], axis=0)              # (D+H, H+D)
    w_slab = jnp.concatenate(
        [_pad_w(params["we_x"]), _pad_w(params["we_h"]), w_big,
         _pad_w(params["wo_h"])], axis=0).astype(bf16)           # (2D+3H, D+H)

    # One f32 bias / BN slab (one DMA): rows [be, ge, bte, bd, gd, btd, bo].
    def _row(v):
        v = v.reshape(1, -1)
        return jnp.pad(v, ((0, 0), (0, Wb - v.shape[1])))
    b_slab = jnp.concatenate(
        [_row(params["be"]), _row(params["ge"]), _row(params["bte"]),
         _row(params["bd"]), _row(params["gd"]), _row(params["btd"]),
         _row(params["bo"])], axis=0).astype(f32)                # (7, max(H,D))

    kernel = functools.partial(rnn_ae_kernel, B=B, T=T, D=D, H=H,
                               cate_groups=tuple(cate_groups))
    vmem = pl.BlockSpec(memory_space=pltpu.MemorySpace.VMEM)
    out_flat = pl.pallas_call(
        kernel,
        out_shape=jax.ShapeDtypeStruct((B, T * D), jnp.float32),
        in_specs=[vmem, vmem, vmem],
        out_specs=vmem,
    )(x_tb, w_slab, b_slab)
    return out_flat.reshape(B, T, D)


# -------- pure-JAX reference (same math & same mixed precision) --------
def _mm(a, w):
    return jnp.dot(a.astype(jnp.bfloat16), w.astype(jnp.bfloat16),
                   preferred_element_type=jnp.float32)


def _bn_ref(v, gamma, beta):
    mean = jnp.mean(v, axis=0, keepdims=True)
    var = jnp.mean((v - mean) ** 2, axis=0, keepdims=True)
    return gamma * (v - mean) * jax.lax.rsqrt(var + BN_EPS) + beta


def rnn_ae_reference(x, params, cate_groups):
    B, T, D = x.shape
    H = params["we_h"].shape[0]

    h = jnp.zeros((B, H), jnp.float32)
    for t in range(T):
        xt = x[:, t, :]
        new_h = jnp.tanh(_mm(xt, params["we_x"]) + _mm(h, params["we_h"])
                         + params["be"])
        h = _bn_ref(new_h + h, params["ge"], params["bte"])
    z = h

    dec_in = jnp.zeros((B, D), jnp.float32)
    h = z
    outs = []
    for t in range(T):
        new_h = jnp.tanh(_mm(dec_in, params["wd_x"]) + _mm(h, params["wd_h"])
                         + params["bd"])
        o = _mm(dec_in, params["wo_x"]) + _mm(new_h, params["wo_h"]) + params["bo"]
        h = _bn_ref(new_h + h, params["gd"], params["btd"])
        outs.append(o[:, None, :])
        ret = o
        for (b0, e0) in cate_groups:
            seg = o[:, b0:e0]
            idx = jnp.argmax(seg, axis=1)                           # (B,)
            hit = jnp.max(jax.nn.one_hot(idx, e0 - b0), axis=0)     # union over batch
            ret = ret.at[:, b0:e0].set(jnp.broadcast_to(hit, (B, e0 - b0)))
        dec_in = ret
    return jnp.concatenate(outs, axis=1)


if __name__ == "__main__":
    # Small synthetic config consistent with the module:
    #   input_dim = (B, T, D), n_hidden = H
    B, T, D, H = 4, 8, 16, 32

    # Synthetic discretizer: begin_pos/end_pos groups over the feature dim.
    # Continuous groups: [0,1), [9,10); categorical groups: [1,4), [4,9).
    # Columns 10..15 are "mask" columns (untouched by decode's feedback).
    begin_pos = [0, 1, 4, 9]
    end_pos = [1, 4, 9, 10]
    cate_groups = tuple((b, e) for b, e in zip(begin_pos, end_pos) if e - 1 != b)

    key = jax.random.PRNGKey(0)
    ks = jax.random.split(key, 8)
    scale = 0.1
    params = {
        "we_x": scale * jax.random.normal(ks[0], (D, H), jnp.float32),
        "we_h": scale * jax.random.normal(ks[1], (H, H), jnp.float32),
        "be": jnp.zeros((1, H), jnp.float32),
        "ge": jnp.ones((1, H), jnp.float32),
        "bte": jnp.zeros((1, H), jnp.float32),
        "wd_x": scale * jax.random.normal(ks[2], (D, H), jnp.float32),
        "wd_h": scale * jax.random.normal(ks[3], (H, H), jnp.float32),
        "bd": jnp.zeros((1, H), jnp.float32),
        "gd": jnp.ones((1, H), jnp.float32),
        "btd": jnp.zeros((1, H), jnp.float32),
        "wo_x": scale * jax.random.normal(ks[4], (D, D), jnp.float32),
        "wo_h": scale * jax.random.normal(ks[5], (H, D), jnp.float32),
        "bo": 0.01 * jax.random.normal(ks[6], (1, D), jnp.float32),
    }
    x = jax.random.normal(ks[7], (B, T, D), jnp.float32)

    out = rnn_ae_forward(x, params, cate_groups)
    out = jax.block_until_ready(out)

    ref = rnn_ae_reference(x, params, cate_groups)
    assert out.shape == (B, T, D)
    if not jnp.allclose(out, ref, atol=1e-2, rtol=1e-2):
        raise AssertionError("Pallas kernel output mismatch vs JAX reference")

    print("KERNEL_OK")
</pallas_src>

<mosaic_0001>
module attributes {stable_mosaic.version = 11 : i64} {
  func.func @rnn_ae_kernel(%arg0: memref<32x16xbf16, #tpu.memory_space<vmem>>, %arg1: memref<128x48xbf16, #tpu.memory_space<vmem>>, %arg2: memref<7x32xf32, #tpu.memory_space<vmem>>, %arg3: memref<4x128xf32, #tpu.memory_space<vmem>>) attributes {dimension_semantics = [], scalar_prefetch = 0 : i64, scratch_operands = 0 : i64, tpu.core_type = #tpu.core_type<tc>} {
    %c0 = arith.constant 0 : index
    %c0_0 = arith.constant 0 : index
    %0 = vector.load %arg1[%c0, %c0_0] : memref<128x48xbf16, #tpu.memory_space<vmem>>, vector<128x48xbf16>
    %1 = vector.extract_strided_slice %0 {offsets = [0, 0], sizes = [16, 32], strides = [1, 1]} : vector<128x48xbf16> to vector<16x32xbf16>
    %2 = vector.extract_strided_slice %0 {offsets = [16, 0], sizes = [32, 32], strides = [1, 1]} : vector<128x48xbf16> to vector<32x32xbf16>
    %3 = vector.extract_strided_slice %0 {offsets = [48, 0], sizes = [48, 48], strides = [1, 1]} : vector<128x48xbf16> to vector<48x48xbf16>
    %4 = vector.extract_strided_slice %0 {offsets = [96, 0], sizes = [32, 16], strides = [1, 1]} : vector<128x48xbf16> to vector<32x16xbf16>
    %c0_1 = arith.constant 0 : index
    %c0_2 = arith.constant 0 : index
    %5 = vector.load %arg2[%c0_1, %c0_2] : memref<7x32xf32, #tpu.memory_space<vmem>>, vector<7x32xf32>
    %6 = vector.extract_strided_slice %5 {offsets = [1, 0], sizes = [1, 32], strides = [1, 1]} : vector<7x32xf32> to vector<1x32xf32>
    %7 = vector.shape_cast %6 : vector<1x32xf32> to vector<1x32xf32>
    %8 = vector.broadcast %7 : vector<1x32xf32> to vector<4x32xf32>
    %9 = vector.extract_strided_slice %5 {offsets = [2, 0], sizes = [1, 32], strides = [1, 1]} : vector<7x32xf32> to vector<1x32xf32>
    %10 = vector.shape_cast %9 : vector<1x32xf32> to vector<1x32xf32>
    %11 = vector.broadcast %10 : vector<1x32xf32> to vector<4x32xf32>
    %12 = vector.extract_strided_slice %5 {offsets = [3, 0], sizes = [1, 32], strides = [1, 1]} : vector<7x32xf32> to vector<1x32xf32>
    %13 = vector.shape_cast %12 : vector<1x32xf32> to vector<1x32xf32>
    %14 = vector.broadcast %13 : vector<1x32xf32> to vector<4x32xf32>
    %15 = vector.extract_strided_slice %5 {offsets = [4, 0], sizes = [1, 32], strides = [1, 1]} : vector<7x32xf32> to vector<1x32xf32>
    %16 = vector.shape_cast %15 : vector<1x32xf32> to vector<1x32xf32>
    %17 = vector.broadcast %16 : vector<1x32xf32> to vector<4x32xf32>
    %18 = vector.extract_strided_slice %5 {offsets = [5, 0], sizes = [1, 32], strides = [1, 1]} : vector<7x32xf32> to vector<1x32xf32>
    %19 = vector.shape_cast %18 : vector<1x32xf32> to vector<1x32xf32>
    %20 = vector.broadcast %19 : vector<1x32xf32> to vector<4x32xf32>
    %21 = vector.extract_strided_slice %5 {offsets = [6, 0], sizes = [1, 16], strides = [1, 1]} : vector<7x32xf32> to vector<1x16xf32>
    %22 = vector.shape_cast %21 : vector<1x16xf32> to vector<1x16xf32>
    %23 = vector.broadcast %22 : vector<1x16xf32> to vector<4x16xf32>
    %c0_3 = arith.constant 0 : index
    %c0_4 = arith.constant 0 : index
    %24 = vector.load %arg0[%c0_3, %c0_4] : memref<32x16xbf16, #tpu.memory_space<vmem>>, vector<32x16xbf16>
    %cst = arith.constant dense<0.000000e+00> : vector<32x32xf32>
    %25 = tpu.matmul %24, %1, %cst {dimension_numbers = #tpu.dot_dimension_numbers<[1], [0], [0], [1], [0, 0, 1, 1], [], []>} : vector<32x16xbf16>, vector<16x32xbf16>, vector<32x32xf32> -> vector<32x32xf32>
    %26 = vector.extract_strided_slice %5 {offsets = [0, 0], sizes = [1, 32], strides = [1, 1]} : vector<7x32xf32> to vector<1x32xf32>
    %27 = vector.shape_cast %26 : vector<1x32xf32> to vector<1x32xf32>
    %28 = vector.broadcast %27 : vector<1x32xf32> to vector<32x32xf32>
    %29 = arith.addf %25, %28 : vector<32x32xf32>
    %cst_5 = arith.constant 0.000000e+00 : f32
    %30 = vector.broadcast %cst_5 : f32 to vector<4x32xf32>
    %31 = vector.extract_strided_slice %29 {offsets = [0, 0], sizes = [4, 32], strides = [1, 1]} : vector<32x32xf32> to vector<4x32xf32>
    %32 = arith.truncf %30 : vector<4x32xf32> to vector<4x32xbf16>
    %cst_6 = arith.constant dense<0.000000e+00> : vector<4x32xf32>
    %33 = tpu.matmul %32, %2, %cst_6 {dimension_numbers = #tpu.dot_dimension_numbers<[1], [0], [0], [1], [0, 0, 1, 1], [], []>} : vector<4x32xbf16>, vector<32x32xbf16>, vector<4x32xf32> -> vector<4x32xf32>
    %34 = arith.addf %31, %33 : vector<4x32xf32>
    %35 = math.tanh %34 : vector<4x32xf32>
    %36 = arith.addf %35, %30 : vector<4x32xf32>
    %cst_7 = arith.constant dense<0.000000e+00> : vector<32xf32>
    %37 = vector.multi_reduction <add>, %36, %cst_7 [0] : vector<4x32xf32> to vector<32xf32>
    %38 = vector.shape_cast %37 : vector<32xf32> to vector<1x32xf32>
    %cst_8 = arith.constant 2.500000e-01 : f32
    %39 = vector.broadcast %cst_8 : f32 to vector<1x32xf32>
    %40 = arith.mulf %38, %39 : vector<1x32xf32>
    %41 = vector.broadcast %40 : vector<1x32xf32> to vector<4x32xf32>
    %42 = arith.subf %36, %41 : vector<4x32xf32>
    %43 = arith.mulf %42, %42 : vector<4x32xf32>
    %cst_9 = arith.constant dense<0.000000e+00> : vector<32xf32>
    %44 = vector.multi_reduction <add>, %43, %cst_9 [0] : vector<4x32xf32> to vector<32xf32>
    %45 = vector.shape_cast %44 : vector<32xf32> to vector<1x32xf32>
    %cst_10 = arith.constant 2.500000e-01 : f32
    %46 = vector.broadcast %cst_10 : f32 to vector<1x32xf32>
    %47 = arith.mulf %45, %46 : vector<1x32xf32>
    %48 = arith.mulf %8, %42 : vector<4x32xf32>
    %cst_11 = arith.constant 9.99999974E-6 : f32
    %49 = vector.broadcast %cst_11 : f32 to vector<1x32xf32>
    %50 = arith.addf %47, %49 : vector<1x32xf32>
    %51 = math.rsqrt %50 : vector<1x32xf32>
    %52 = vector.broadcast %51 : vector<1x32xf32> to vector<4x32xf32>
    %53 = arith.mulf %48, %52 : vector<4x32xf32>
    %54 = arith.addf %53, %11 : vector<4x32xf32>
    %55 = vector.extract_strided_slice %29 {offsets = [4, 0], sizes = [4, 32], strides = [1, 1]} : vector<32x32xf32> to vector<4x32xf32>
    %56 = arith.truncf %54 : vector<4x32xf32> to vector<4x32xbf16>
    %cst_12 = arith.constant dense<0.000000e+00> : vector<4x32xf32>
    %57 = tpu.matmul %56, %2, %cst_12 {dimension_numbers = #tpu.dot_dimension_numbers<[1], [0], [0], [1], [0, 0, 1, 1], [], []>} : vector<4x32xbf16>, vector<32x32xbf16>, vector<4x32xf32> -> vector<4x32xf32>
    %58 = arith.addf %55, %57 : vector<4x32xf32>
    %59 = math.tanh %58 : vector<4x32xf32>
    %60 = arith.addf %59, %54 : vector<4x32xf32>
    %cst_13 = arith.constant dense<0.000000e+00> : vector<32xf32>
    %61 = vector.multi_reduction <add>, %60, %cst_13 [0] : vector<4x32xf32> to vector<32xf32>
    %62 = vector.shape_cast %61 : vector<32xf32> to vector<1x32xf32>
    %cst_14 = arith.constant 2.500000e-01 : f32
    %63 = vector.broadcast %cst_14 : f32 to vector<1x32xf32>
    %64 = arith.mulf %62, %63 : vector<1x32xf32>
    %65 = vector.broadcast %64 : vector<1x32xf32> to vector<4x32xf32>
    %66 = arith.subf %60, %65 : vector<4x32xf32>
    %67 = arith.mulf %66, %66 : vector<4x32xf32>
    %cst_15 = arith.constant dense<0.000000e+00> : vector<32xf32>
    %68 = vector.multi_reduction <add>, %67, %cst_15 [0] : vector<4x32xf32> to vector<32xf32>
    %69 = vector.shape_cast %68 : vector<32xf32> to vector<1x32xf32>
    %cst_16 = arith.constant 2.500000e-01 : f32
    %70 = vector.broadcast %cst_16 : f32 to vector<1x32xf32>
    %71 = arith.mulf %69, %70 : vector<1x32xf32>
    %72 = arith.mulf %8, %66 : vector<4x32xf32>
    %cst_17 = arith.constant 9.99999974E-6 : f32
    %73 = vector.broadcast %cst_17 : f32 to vector<1x32xf32>
    %74 = arith.addf %71, %73 : vector<1x32xf32>
    %75 = math.rsqrt %74 : vector<1x32xf32>
    %76 = vector.broadcast %75 : vector<1x32xf32> to vector<4x32xf32>
    %77 = arith.mulf %72, %76 : vector<4x32xf32>
    %78 = arith.addf %77, %11 : vector<4x32xf32>
    %79 = vector.extract_strided_slice %29 {offsets = [8, 0], sizes = [4, 32], strides = [1, 1]} : vector<32x32xf32> to vector<4x32xf32>
    %80 = arith.truncf %78 : vector<4x32xf32> to vector<4x32xbf16>
    %cst_18 = arith.constant dense<0.000000e+00> : vector<4x32xf32>
    %81 = tpu.matmul %80, %2, %cst_18 {dimension_numbers = #tpu.dot_dimension_numbers<[1], [0], [0], [1], [0, 0, 1, 1], [], []>} : vector<4x32xbf16>, vector<32x32xbf16>, vector<4x32xf32> -> vector<4x32xf32>
    %82 = arith.addf %79, %81 : vector<4x32xf32>
    %83 = math.tanh %82 : vector<4x32xf32>
    %84 = arith.addf %83, %78 : vector<4x32xf32>
    %cst_19 = arith.constant dense<0.000000e+00> : vector<32xf32>
    %85 = vector.multi_reduction <add>, %84, %cst_19 [0] : vector<4x32xf32> to vector<32xf32>
    %86 = vector.shape_cast %85 : vector<32xf32> to vector<1x32xf32>
    %cst_20 = arith.constant 2.500000e-01 : f32
    %87 = vector.broadcast %cst_20 : f32 to vector<1x32xf32>
    %88 = arith.mulf %86, %87 : vector<1x32xf32>
    %89 = vector.broadcast %88 : vector<1x32xf32> to vector<4x32xf32>
    %90 = arith.subf %84, %89 : vector<4x32xf32>
    %91 = arith.mulf %90, %90 : vector<4x32xf32>
    %cst_21 = arith.constant dense<0.000000e+00> : vector<32xf32>
    %92 = vector.multi_reduction <add>, %91, %cst_21 [0] : vector<4x32xf32> to vector<32xf32>
    %93 = vector.shape_cast %92 : vector<32xf32> to vector<1x32xf32>
    %cst_22 = arith.constant 2.500000e-01 : f32
    %94 = vector.broadcast %cst_22 : f32 to vector<1x32xf32>
    %95 = arith.mulf %93, %94 : vector<1x32xf32>
    %96 = arith.mulf %8, %90 : vector<4x32xf32>
    %cst_23 = arith.constant 9.99999974E-6 : f32
    %97 = vector.broadcast %cst_23 : f32 to vector<1x32xf32>
    %98 = arith.addf %95, %97 : vector<1x32xf32>
    %99 = math.rsqrt %98 : vector<1x32xf32>
    %100 = vector.broadcast %99 : vector<1x32xf32> to vector<4x32xf32>
    %101 = arith.mulf %96, %100 : vector<4x32xf32>
    %102 = arith.addf %101, %11 : vector<4x32xf32>
    %103 = vector.extract_strided_slice %29 {offsets = [12, 0], sizes = [4, 32], strides = [1, 1]} : vector<32x32xf32> to vector<4x32xf32>
    %104 = arith.truncf %102 : vector<4x32xf32> to vector<4x32xbf16>
    %cst_24 = arith.constant dense<0.000000e+00> : vector<4x32xf32>
    %105 = tpu.matmul %104, %2, %cst_24 {dimension_numbers = #tpu.dot_dimension_numbers<[1], [0], [0], [1], [0, 0, 1, 1], [], []>} : vector<4x32xbf16>, vector<32x32xbf16>, vector<4x32xf32> -> vector<4x32xf32>
    %106 = arith.addf %103, %105 : vector<4x32xf32>
    %107 = math.tanh %106 : vector<4x32xf32>
    %108 = arith.addf %107, %102 : vector<4x32xf32>
    %cst_25 = arith.constant dense<0.000000e+00> : vector<32xf32>
    %109 = vector.multi_reduction <add>, %108, %cst_25 [0] : vector<4x32xf32> to vector<32xf32>
    %110 = vector.shape_cast %109 : vector<32xf32> to vector<1x32xf32>
    %cst_26 = arith.constant 2.500000e-01 : f32
    %111 = vector.broadcast %cst_26 : f32 to vector<1x32xf32>
    %112 = arith.mulf %110, %111 : vector<1x32xf32>
    %113 = vector.broadcast %112 : vector<1x32xf32> to vector<4x32xf32>
    %114 = arith.subf %108, %113 : vector<4x32xf32>
    %115 = arith.mulf %114, %114 : vector<4x32xf32>
    %cst_27 = arith.constant dense<0.000000e+00> : vector<32xf32>
    %116 = vector.multi_reduction <add>, %115, %cst_27 [0] : vector<4x32xf32> to vector<32xf32>
    %117 = vector.shape_cast %116 : vector<32xf32> to vector<1x32xf32>
    %cst_28 = arith.constant 2.500000e-01 : f32
    %118 = vector.broadcast %cst_28 : f32 to vector<1x32xf32>
    %119 = arith.mulf %117, %118 : vector<1x32xf32>
    %120 = arith.mulf %8, %114 : vector<4x32xf32>
    %cst_29 = arith.constant 9.99999974E-6 : f32
    %121 = vector.broadcast %cst_29 : f32 to vector<1x32xf32>
    %122 = arith.addf %119, %121 : vector<1x32xf32>
    %123 = math.rsqrt %122 : vector<1x32xf32>
    %124 = vector.broadcast %123 : vector<1x32xf32> to vector<4x32xf32>
    %125 = arith.mulf %120, %124 : vector<4x32xf32>
    %126 = arith.addf %125, %11 : vector<4x32xf32>
    %127 = vector.extract_strided_slice %29 {offsets = [16, 0], sizes = [4, 32], strides = [1, 1]} : vector<32x32xf32> to vector<4x32xf32>
    %128 = arith.truncf %126 : vector<4x32xf32> to vector<4x32xbf16>
    %cst_30 = arith.constant dense<0.000000e+00> : vector<4x32xf32>
    %129 = tpu.matmul %128, %2, %cst_30 {dimension_numbers = #tpu.dot_dimension_numbers<[1], [0], [0], [1], [0, 0, 1, 1], [], []>} : vector<4x32xbf16>, vector<32x32xbf16>, vector<4x32xf32> -> vector<4x32xf32>
    %130 = arith.addf %127, %129 : vector<4x32xf32>
    %131 = math.tanh %130 : vector<4x32xf32>
    %132 = arith.addf %131, %126 : vector<4x32xf32>
    %cst_31 = arith.constant dense<0.000000e+00> : vector<32xf32>
    %133 = vector.multi_reduction <add>, %132, %cst_31 [0] : vector<4x32xf32> to vector<32xf32>
    %134 = vector.shape_cast %133 : vector<32xf32> to vector<1x32xf32>
    %cst_32 = arith.constant 2.500000e-01 : f32
    %135 = vector.broadcast %cst_32 : f32 to vector<1x32xf32>
    %136 = arith.mulf %134, %135 : vector<1x32xf32>
    %137 = vector.broadcast %136 : vector<1x32xf32> to vector<4x32xf32>
    %138 = arith.subf %132, %137 : vector<4x32xf32>
    %139 = arith.mulf %138, %138 : vector<4x32xf32>
    %cst_33 = arith.constant dense<0.000000e+00> : vector<32xf32>
    %140 = vector.multi_reduction <add>, %139, %cst_33 [0] : vector<4x32xf32> to vector<32xf32>
    %141 = vector.shape_cast %140 : vector<32xf32> to vector<1x32xf32>
    %cst_34 = arith.constant 2.500000e-01 : f32
    %142 = vector.broadcast %cst_34 : f32 to vector<1x32xf32>
    %143 = arith.mulf %141, %142 : vector<1x32xf32>
    %144 = arith.mulf %8, %138 : vector<4x32xf32>
    %cst_35 = arith.constant 9.99999974E-6 : f32
    %145 = vector.broadcast %cst_35 : f32 to vector<1x32xf32>
    %146 = arith.addf %143, %145 : vector<1x32xf32>
    %147 = math.rsqrt %146 : vector<1x32xf32>
    %148 = vector.broadcast %147 : vector<1x32xf32> to vector<4x32xf32>
    %149 = arith.mulf %144, %148 : vector<4x32xf32>
    %150 = arith.addf %149, %11 : vector<4x32xf32>
    %151 = vector.extract_strided_slice %29 {offsets = [20, 0], sizes = [4, 32], strides = [1, 1]} : vector<32x32xf32> to vector<4x32xf32>
    %152 = arith.truncf %150 : vector<4x32xf32> to vector<4x32xbf16>
    %cst_36 = arith.constant dense<0.000000e+00> : vector<4x32xf32>
    %153 = tpu.matmul %152, %2, %cst_36 {dimension_numbers = #tpu.dot_dimension_numbers<[1], [0], [0], [1], [0, 0, 1, 1], [], []>} : vector<4x32xbf16>, vector<32x32xbf16>, vector<4x32xf32> -> vector<4x32xf32>
    %154 = arith.addf %151, %153 : vector<4x32xf32>
    %155 = math.tanh %154 : vector<4x32xf32>
    %156 = arith.addf %155, %150 : vector<4x32xf32>
    %cst_37 = arith.constant dense<0.000000e+00> : vector<32xf32>
    %157 = vector.multi_reduction <add>, %156, %cst_37 [0] : vector<4x32xf32> to vector<32xf32>
    %158 = vector.shape_cast %157 : vector<32xf32> to vector<1x32xf32>
    %cst_38 = arith.constant 2.500000e-01 : f32
    %159 = vector.broadcast %cst_38 : f32 to vector<1x32xf32>
    %160 = arith.mulf %158, %159 : vector<1x32xf32>
    %161 = vector.broadcast %160 : vector<1x32xf32> to vector<4x32xf32>
    %162 = arith.subf %156, %161 : vector<4x32xf32>
    %163 = arith.mulf %162, %162 : vector<4x32xf32>
    %cst_39 = arith.constant dense<0.000000e+00> : vector<32xf32>
    %164 = vector.multi_reduction <add>, %163, %cst_39 [0] : vector<4x32xf32> to vector<32xf32>
    %165 = vector.shape_cast %164 : vector<32xf32> to vector<1x32xf32>
    %cst_40 = arith.constant 2.500000e-01 : f32
    %166 = vector.broadcast %cst_40 : f32 to vector<1x32xf32>
    %167 = arith.mulf %165, %166 : vector<1x32xf32>
    %168 = arith.mulf %8, %162 : vector<4x32xf32>
    %cst_41 = arith.constant 9.99999974E-6 : f32
    %169 = vector.broadcast %cst_41 : f32 to vector<1x32xf32>
    %170 = arith.addf %167, %169 : vector<1x32xf32>
    %171 = math.rsqrt %170 : vector<1x32xf32>
    %172 = vector.broadcast %171 : vector<1x32xf32> to vector<4x32xf32>
    %173 = arith.mulf %168, %172 : vector<4x32xf32>
    %174 = arith.addf %173, %11 : vector<4x32xf32>
    %175 = vector.extract_strided_slice %29 {offsets = [24, 0], sizes = [4, 32], strides = [1, 1]} : vector<32x32xf32> to vector<4x32xf32>
    %176 = arith.truncf %174 : vector<4x32xf32> to vector<4x32xbf16>
    %cst_42 = arith.constant dense<0.000000e+00> : vector<4x32xf32>
    %177 = tpu.matmul %176, %2, %cst_42 {dimension_numbers = #tpu.dot_dimension_numbers<[1], [0], [0], [1], [0, 0, 1, 1], [], []>} : vector<4x32xbf16>, vector<32x32xbf16>, vector<4x32xf32> -> vector<4x32xf32>
    %178 = arith.addf %175, %177 : vector<4x32xf32>
    %179 = math.tanh %178 : vector<4x32xf32>
    %180 = arith.addf %179, %174 : vector<4x32xf32>
    %cst_43 = arith.constant dense<0.000000e+00> : vector<32xf32>
    %181 = vector.multi_reduction <add>, %180, %cst_43 [0] : vector<4x32xf32> to vector<32xf32>
    %182 = vector.shape_cast %181 : vector<32xf32> to vector<1x32xf32>
    %cst_44 = arith.constant 2.500000e-01 : f32
    %183 = vector.broadcast %cst_44 : f32 to vector<1x32xf32>
    %184 = arith.mulf %182, %183 : vector<1x32xf32>
    %185 = vector.broadcast %184 : vector<1x32xf32> to vector<4x32xf32>
    %186 = arith.subf %180, %185 : vector<4x32xf32>
    %187 = arith.mulf %186, %186 : vector<4x32xf32>
    %cst_45 = arith.constant dense<0.000000e+00> : vector<32xf32>
    %188 = vector.multi_reduction <add>, %187, %cst_45 [0] : vector<4x32xf32> to vector<32xf32>
    %189 = vector.shape_cast %188 : vector<32xf32> to vector<1x32xf32>
    %cst_46 = arith.constant 2.500000e-01 : f32
    %190 = vector.broadcast %cst_46 : f32 to vector<1x32xf32>
    %191 = arith.mulf %189, %190 : vector<1x32xf32>
    %192 = arith.mulf %8, %186 : vector<4x32xf32>
    %cst_47 = arith.constant 9.99999974E-6 : f32
    %193 = vector.broadcast %cst_47 : f32 to vector<1x32xf32>
    %194 = arith.addf %191, %193 : vector<1x32xf32>
    %195 = math.rsqrt %194 : vector<1x32xf32>
    %196 = vector.broadcast %195 : vector<1x32xf32> to vector<4x32xf32>
    %197 = arith.mulf %192, %196 : vector<4x32xf32>
    %198 = arith.addf %197, %11 : vector<4x32xf32>
    %199 = vector.extract_strided_slice %29 {offsets = [28, 0], sizes = [4, 32], strides = [1, 1]} : vector<32x32xf32> to vector<4x32xf32>
    %200 = arith.truncf %198 : vector<4x32xf32> to vector<4x32xbf16>
    %cst_48 = arith.constant dense<0.000000e+00> : vector<4x32xf32>
    %201 = tpu.matmul %200, %2, %cst_48 {dimension_numbers = #tpu.dot_dimension_numbers<[1], [0], [0], [1], [0, 0, 1, 1], [], []>} : vector<4x32xbf16>, vector<32x32xbf16>, vector<4x32xf32> -> vector<4x32xf32>
    %202 = arith.addf %199, %201 : vector<4x32xf32>
    %203 = math.tanh %202 : vector<4x32xf32>
    %204 = arith.addf %203, %198 : vector<4x32xf32>
    %cst_49 = arith.constant dense<0.000000e+00> : vector<32xf32>
    %205 = vector.multi_reduction <add>, %204, %cst_49 [0] : vector<4x32xf32> to vector<32xf32>
    %206 = vector.shape_cast %205 : vector<32xf32> to vector<1x32xf32>
    %cst_50 = arith.constant 2.500000e-01 : f32
    %207 = vector.broadcast %cst_50 : f32 to vector<1x32xf32>
    %208 = arith.mulf %206, %207 : vector<1x32xf32>
    %209 = vector.broadcast %208 : vector<1x32xf32> to vector<4x32xf32>
    %210 = arith.subf %204, %209 : vector<4x32xf32>
    %211 = arith.mulf %210, %210 : vector<4x32xf32>
    %cst_51 = arith.constant dense<0.000000e+00> : vector<32xf32>
    %212 = vector.multi_reduction <add>, %211, %cst_51 [0] : vector<4x32xf32> to vector<32xf32>
    %213 = vector.shape_cast %212 : vector<32xf32> to vector<1x32xf32>
    %cst_52 = arith.constant 2.500000e-01 : f32
    %214 = vector.broadcast %cst_52 : f32 to vector<1x32xf32>
    %215 = arith.mulf %213, %214 : vector<1x32xf32>
    %216 = arith.mulf %8, %210 : vector<4x32xf32>
    %cst_53 = arith.constant 9.99999974E-6 : f32
    %217 = vector.broadcast %cst_53 : f32 to vector<1x32xf32>
    %218 = arith.addf %215, %217 : vector<1x32xf32>
    %219 = math.rsqrt %218 : vector<1x32xf32>
    %220 = vector.broadcast %219 : vector<1x32xf32> to vector<4x32xf32>
    %221 = arith.mulf %216, %220 : vector<4x32xf32>
    %222 = arith.addf %221, %11 : vector<4x32xf32>
    %223 = tpu.iota {dimensions = array<i32: 1>} : vector<4x16xi32>
    %224 = tpu.iota {dimensions = array<i32: 1>} : vector<8x16xi32>
    %225 = tpu.iota {dimensions = array<i32: 0>} : vector<8x16xi32>
    %c1_i32 = arith.constant 1 : i32
    %226 = vector.broadcast %c1_i32 : i32 to vector<8x16xi32>
    %227 = arith.cmpi sge, %224, %226 : vector<8x16xi32>
    %c4_i32 = arith.constant 4 : i32
    %228 = vector.broadcast %c4_i32 : i32 to vector<8x16xi32>
    %229 = arith.cmpi slt, %224, %228 : vector<8x16xi32>
    %230 = arith.andi %227, %229 : vector<8x16xi1>
    %c0_i32 = arith.constant 0 : i32
    %231 = vector.broadcast %c0_i32 : i32 to vector<8x16xi32>
    %232 = arith.cmpi sge, %225, %231 : vector<8x16xi32>
    %c4_i32_54 = arith.constant 4 : i32
    %233 = vector.broadcast %c4_i32_54 : i32 to vector<8x16xi32>
    %234 = arith.cmpi slt, %225, %233 : vector<8x16xi32>
    %235 = arith.andi %232, %234 : vector<8x16xi1>
    %236 = arith.andi %230, %235 : vector<8x16xi1>
    %c1_i32_55 = arith.constant 1 : i32
    %237 = vector.broadcast %c1_i32_55 : i32 to vector<4x16xi32>
    %238 = arith.cmpi sge, %223, %237 : vector<4x16xi32>
    %c4_i32_56 = arith.constant 4 : i32
    %239 = vector.broadcast %c4_i32_56 : i32 to vector<4x16xi32>
    %240 = arith.cmpi slt, %223, %239 : vector<4x16xi32>
    %241 = arith.andi %238, %240 : vector<4x16xi1>
    %c4_i32_57 = arith.constant 4 : i32
    %242 = vector.broadcast %c4_i32_57 : i32 to vector<8x16xi32>
    %243 = arith.cmpi sge, %224, %242 : vector<8x16xi32>
    %c9_i32 = arith.constant 9 : i32
    %244 = vector.broadcast %c9_i32 : i32 to vector<8x16xi32>
    %245 = arith.cmpi slt, %224, %244 : vector<8x16xi32>
    %246 = arith.andi %243, %245 : vector<8x16xi1>
    %c4_i32_58 = arith.constant 4 : i32
    %247 = vector.broadcast %c4_i32_58 : i32 to vector<8x16xi32>
    %248 = arith.cmpi sge, %225, %247 : vector<8x16xi32>
    %c8_i32 = arith.constant 8 : i32
    %249 = vector.broadcast %c8_i32 : i32 to vector<8x16xi32>
    %250 = arith.cmpi slt, %225, %249 : vector<8x16xi32>
    %251 = arith.andi %248, %250 : vector<8x16xi1>
    %252 = arith.andi %246, %251 : vector<8x16xi1>
    %253 = arith.ori %236, %252 : vector<8x16xi1>
    %c4_i32_59 = arith.constant 4 : i32
    %254 = vector.broadcast %c4_i32_59 : i32 to vector<4x16xi32>
    %255 = arith.cmpi sge, %223, %254 : vector<4x16xi32>
    %c9_i32_60 = arith.constant 9 : i32
    %256 = vector.broadcast %c9_i32_60 : i32 to vector<4x16xi32>
    %257 = arith.cmpi slt, %223, %256 : vector<4x16xi32>
    %258 = arith.andi %255, %257 : vector<4x16xi1>
    %259 = arith.ori %241, %258 : vector<4x16xi1>
    %cst_61 = arith.constant 0.000000e+00 : f32
    %260 = vector.broadcast %cst_61 : f32 to vector<4x16xf32>
    %261 = tpu.concatenate %260, %222 in 1 : vector<4x16xf32>, vector<4x32xf32> -> vector<4x48xf32>
    %262 = arith.truncf %261 : vector<4x48xf32> to vector<4x48xbf16>
    %cst_62 = arith.constant dense<0.000000e+00> : vector<4x48xf32>
    %263 = tpu.matmul %262, %3, %cst_62 {dimension_numbers = #tpu.dot_dimension_numbers<[1], [0], [0], [1], [0, 0, 1, 1], [], []>} : vector<4x48xbf16>, vector<48x48xbf16>, vector<4x48xf32> -> vector<4x48xf32>
    %264 = vector.extract_strided_slice %263 {offsets = [0, 0], sizes = [4, 32], strides = [1, 1]} : vector<4x48xf32> to vector<4x32xf32>
    %265 = arith.addf %264, %14 : vector<4x32xf32>
    %266 = math.tanh %265 : vector<4x32xf32>
    %267 = vector.extract_strided_slice %263 {offsets = [0, 32], sizes = [4, 16], strides = [1, 1]} : vector<4x48xf32> to vector<4x16xf32>
    %268 = arith.truncf %266 : vector<4x32xf32> to vector<4x32xbf16>
    %cst_63 = arith.constant dense<0.000000e+00> : vector<4x16xf32>
    %269 = tpu.matmul %268, %4, %cst_63 {dimension_numbers = #tpu.dot_dimension_numbers<[1], [0], [0], [1], [0, 0, 1, 1], [], []>} : vector<4x32xbf16>, vector<32x16xbf16>, vector<4x16xf32> -> vector<4x16xf32>
    %270 = arith.addf %267, %269 : vector<4x16xf32>
    %271 = arith.addf %270, %23 : vector<4x16xf32>
    %272 = arith.addf %266, %222 : vector<4x32xf32>
    %cst_64 = arith.constant dense<0.000000e+00> : vector<32xf32>
    %273 = vector.multi_reduction <add>, %272, %cst_64 [0] : vector<4x32xf32> to vector<32xf32>
    %274 = vector.shape_cast %273 : vector<32xf32> to vector<1x32xf32>
    %cst_65 = arith.constant 2.500000e-01 : f32
    %275 = vector.broadcast %cst_65 : f32 to vector<1x32xf32>
    %276 = arith.mulf %274, %275 : vector<1x32xf32>
    %277 = vector.broadcast %276 : vector<1x32xf32> to vector<4x32xf32>
    %278 = arith.subf %272, %277 : vector<4x32xf32>
    %279 = arith.mulf %278, %278 : vector<4x32xf32>
    %cst_66 = arith.constant dense<0.000000e+00> : vector<32xf32>
    %280 = vector.multi_reduction <add>, %279, %cst_66 [0] : vector<4x32xf32> to vector<32xf32>
    %281 = vector.shape_cast %280 : vector<32xf32> to vector<1x32xf32>
    %cst_67 = arith.constant 2.500000e-01 : f32
    %282 = vector.broadcast %cst_67 : f32 to vector<1x32xf32>
    %283 = arith.mulf %281, %282 : vector<1x32xf32>
    %284 = arith.mulf %17, %278 : vector<4x32xf32>
    %cst_68 = arith.constant 9.99999974E-6 : f32
    %285 = vector.broadcast %cst_68 : f32 to vector<1x32xf32>
    %286 = arith.addf %283, %285 : vector<1x32xf32>
    %287 = math.rsqrt %286 : vector<1x32xf32>
    %288 = vector.broadcast %287 : vector<1x32xf32> to vector<4x32xf32>
    %289 = arith.mulf %284, %288 : vector<4x32xf32>
    %290 = arith.addf %289, %20 : vector<4x32xf32>
    %291 = tpu.concatenate %271, %271 in 0 : vector<4x16xf32>, vector<4x16xf32> -> vector<8x16xf32>
    %cst_69 = arith.constant 0xFF800000 : f32
    %292 = vector.broadcast %cst_69 : f32 to vector<8x16xf32>
    %293 = arith.select %253, %291, %292 : vector<8x16xi1>, vector<8x16xf32>
    %cst_70 = arith.constant dense<0xFF800000> : vector<8xf32>
    %294 = vector.multi_reduction <maximumf>, %293, %cst_70 [1] : vector<8x16xf32> to vector<8xf32>
    %295 = vector.shape_cast %294 : vector<8xf32> to vector<8x1xf32>
    %296 = vector.broadcast %295 : vector<8x1xf32> to vector<8x16xf32>
    %297 = arith.cmpf oeq, %293, %296 : vector<8x16xf32>
    %c16_i32 = arith.constant 16 : i32
    %298 = vector.broadcast %c16_i32 : i32 to vector<8x16xi32>
    %299 = arith.select %297, %224, %298 : vector<8x16xi1>, vector<8x16xi32>
    %cst_71 = arith.constant dense<2147483647> : vector<8xi32>
    %300 = vector.multi_reduction <minsi>, %299, %cst_71 [1] : vector<8x16xi32> to vector<8xi32>
    %301 = vector.shape_cast %300 : vector<8xi32> to vector<8x1xi32>
    %302 = vector.broadcast %301 : vector<8x1xi32> to vector<8x16xi32>
    %303 = arith.cmpi eq, %224, %302 : vector<8x16xi32>
    %304 = arith.extui %303 : vector<8x16xi1> to vector<8x16xi32>
    %305 = arith.sitofp %304 : vector<8x16xi32> to vector<8x16xf32>
    %cst_72 = arith.constant dense<0xFF800000> : vector<16xf32>
    %306 = vector.multi_reduction <maximumf>, %305, %cst_72 [0] : vector<8x16xf32> to vector<16xf32>
    %307 = vector.shape_cast %306 : vector<16xf32> to vector<1x16xf32>
    %308 = vector.shape_cast %307 : vector<1x16xf32> to vector<1x16xf32>
    %309 = vector.broadcast %308 : vector<1x16xf32> to vector<4x16xf32>
    %310 = arith.select %259, %309, %271 : vector<4x16xi1>, vector<4x16xf32>
    %311 = tpu.concatenate %310, %290 in 1 : vector<4x16xf32>, vector<4x32xf32> -> vector<4x48xf32>
    %312 = arith.truncf %311 : vector<4x48xf32> to vector<4x48xbf16>
    %cst_73 = arith.constant dense<0.000000e+00> : vector<4x48xf32>
    %313 = tpu.matmul %312, %3, %cst_73 {dimension_numbers = #tpu.dot_dimension_numbers<[1], [0], [0], [1], [0, 0, 1, 1], [], []>} : vector<4x48xbf16>, vector<48x48xbf16>, vector<4x48xf32> -> vector<4x48xf32>
    %314 = vector.extract_strided_slice %313 {offsets = [0, 0], sizes = [4, 32], strides = [1, 1]} : vector<4x48xf32> to vector<4x32xf32>
    %315 = arith.addf %314, %14 : vector<4x32xf32>
    %316 = math.tanh %315 : vector<4x32xf32>
    %317 = vector.extract_strided_slice %313 {offsets = [0, 32], sizes = [4, 16], strides = [1, 1]} : vector<4x48xf32> to vector<4x16xf32>
    %318 = arith.truncf %316 : vector<4x32xf32> to vector<4x32xbf16>
    %cst_74 = arith.constant dense<0.000000e+00> : vector<4x16xf32>
    %319 = tpu.matmul %318, %4, %cst_74 {dimension_numbers = #tpu.dot_dimension_numbers<[1], [0], [0], [1], [0, 0, 1, 1], [], []>} : vector<4x32xbf16>, vector<32x16xbf16>, vector<4x16xf32> -> vector<4x16xf32>
    %320 = arith.addf %317, %319 : vector<4x16xf32>
    %321 = arith.addf %320, %23 : vector<4x16xf32>
    %322 = arith.addf %316, %290 : vector<4x32xf32>
    %cst_75 = arith.constant dense<0.000000e+00> : vector<32xf32>
    %323 = vector.multi_reduction <add>, %322, %cst_75 [0] : vector<4x32xf32> to vector<32xf32>
    %324 = vector.shape_cast %323 : vector<32xf32> to vector<1x32xf32>
    %cst_76 = arith.constant 2.500000e-01 : f32
    %325 = vector.broadcast %cst_76 : f32 to vector<1x32xf32>
    %326 = arith.mulf %324, %325 : vector<1x32xf32>
    %327 = vector.broadcast %326 : vector<1x32xf32> to vector<4x32xf32>
    %328 = arith.subf %322, %327 : vector<4x32xf32>
    %329 = arith.mulf %328, %328 : vector<4x32xf32>
    %cst_77 = arith.constant dense<0.000000e+00> : vector<32xf32>
    %330 = vector.multi_reduction <add>, %329, %cst_77 [0] : vector<4x32xf32> to vector<32xf32>
    %331 = vector.shape_cast %330 : vector<32xf32> to vector<1x32xf32>
    %cst_78 = arith.constant 2.500000e-01 : f32
    %332 = vector.broadcast %cst_78 : f32 to vector<1x32xf32>
    %333 = arith.mulf %331, %332 : vector<1x32xf32>
    %334 = arith.mulf %17, %328 : vector<4x32xf32>
    %cst_79 = arith.constant 9.99999974E-6 : f32
    %335 = vector.broadcast %cst_79 : f32 to vector<1x32xf32>
    %336 = arith.addf %333, %335 : vector<1x32xf32>
    %337 = math.rsqrt %336 : vector<1x32xf32>
    %338 = vector.broadcast %337 : vector<1x32xf32> to vector<4x32xf32>
    %339 = arith.mulf %334, %338 : vector<4x32xf32>
    %340 = arith.addf %339, %20 : vector<4x32xf32>
    %341 = tpu.concatenate %321, %321 in 0 : vector<4x16xf32>, vector<4x16xf32> -> vector<8x16xf32>
    %cst_80 = arith.constant 0xFF800000 : f32
    %342 = vector.broadcast %cst_80 : f32 to vector<8x16xf32>
    %343 = arith.select %253, %341, %342 : vector<8x16xi1>, vector<8x16xf32>
    %cst_81 = arith.constant dense<0xFF800000> : vector<8xf32>
    %344 = vector.multi_reduction <maximumf>, %343, %cst_81 [1] : vector<8x16xf32> to vector<8xf32>
    %345 = vector.shape_cast %344 : vector<8xf32> to vector<8x1xf32>
    %346 = vector.broadcast %345 : vector<8x1xf32> to vector<8x16xf32>
    %347 = arith.cmpf oeq, %343, %346 : vector<8x16xf32>
    %c16_i32_82 = arith.constant 16 : i32
    %348 = vector.broadcast %c16_i32_82 : i32 to vector<8x16xi32>
    %349 = arith.select %347, %224, %348 : vector<8x16xi1>, vector<8x16xi32>
    %cst_83 = arith.constant dense<2147483647> : vector<8xi32>
    %350 = vector.multi_reduction <minsi>, %349, %cst_83 [1] : vector<8x16xi32> to vector<8xi32>
    %351 = vector.shape_cast %350 : vector<8xi32> to vector<8x1xi32>
    %352 = vector.broadcast %351 : vector<8x1xi32> to vector<8x16xi32>
    %353 = arith.cmpi eq, %224, %352 : vector<8x16xi32>
    %354 = arith.extui %353 : vector<8x16xi1> to vector<8x16xi32>
    %355 = arith.sitofp %354 : vector<8x16xi32> to vector<8x16xf32>
    %cst_84 = arith.constant dense<0xFF800000> : vector<16xf32>
    %356 = vector.multi_reduction <maximumf>, %355, %cst_84 [0] : vector<8x16xf32> to vector<16xf32>
    %357 = vector.shape_cast %356 : vector<16xf32> to vector<1x16xf32>
    %358 = vector.shape_cast %357 : vector<1x16xf32> to vector<1x16xf32>
    %359 = vector.broadcast %358 : vector<1x16xf32> to vector<4x16xf32>
    %360 = arith.select %259, %359, %321 : vector<4x16xi1>, vector<4x16xf32>
    %361 = tpu.concatenate %360, %340 in 1 : vector<4x16xf32>, vector<4x32xf32> -> vector<4x48xf32>
    %362 = arith.truncf %361 : vector<4x48xf32> to vector<4x48xbf16>
    %cst_85 = arith.constant dense<0.000000e+00> : vector<4x48xf32>
    %363 = tpu.matmul %362, %3, %cst_85 {dimension_numbers = #tpu.dot_dimension_numbers<[1], [0], [0], [1], [0, 0, 1, 1], [], []>} : vector<4x48xbf16>, vector<48x48xbf16>, vector<4x48xf32> -> vector<4x48xf32>
    %364 = vector.extract_strided_slice %363 {offsets = [0, 0], sizes = [4, 32], strides = [1, 1]} : vector<4x48xf32> to vector<4x32xf32>
    %365 = arith.addf %364, %14 : vector<4x32xf32>
    %366 = math.tanh %365 : vector<4x32xf32>
    %367 = vector.extract_strided_slice %363 {offsets = [0, 32], sizes = [4, 16], strides = [1, 1]} : vector<4x48xf32> to vector<4x16xf32>
    %368 = arith.truncf %366 : vector<4x32xf32> to vector<4x32xbf16>
    %cst_86 = arith.constant dense<0.000000e+00> : vector<4x16xf32>
    %369 = tpu.matmul %368, %4, %cst_86 {dimension_numbers = #tpu.dot_dimension_numbers<[1], [0], [0], [1], [0, 0, 1, 1], [], []>} : vector<4x32xbf16>, vector<32x16xbf16>, vector<4x16xf32> -> vector<4x16xf32>
    %370 = arith.addf %367, %369 : vector<4x16xf32>
    %371 = arith.addf %370, %23 : vector<4x16xf32>
    %372 = arith.addf %366, %340 : vector<4x32xf32>
    %cst_87 = arith.constant dense<0.000000e+00> : vector<32xf32>
    %373 = vector.multi_reduction <add>, %372, %cst_87 [0] : vector<4x32xf32> to vector<32xf32>
    %374 = vector.shape_cast %373 : vector<32xf32> to vector<1x32xf32>
    %cst_88 = arith.constant 2.500000e-01 : f32
    %375 = vector.broadcast %cst_88 : f32 to vector<1x32xf32>
    %376 = arith.mulf %374, %375 : vector<1x32xf32>
    %377 = vector.broadcast %376 : vector<1x32xf32> to vector<4x32xf32>
    %378 = arith.subf %372, %377 : vector<4x32xf32>
    %379 = arith.mulf %378, %378 : vector<4x32xf32>
    %cst_89 = arith.constant dense<0.000000e+00> : vector<32xf32>
    %380 = vector.multi_reduction <add>, %379, %cst_89 [0] : vector<4x32xf32> to vector<32xf32>
    %381 = vector.shape_cast %380 : vector<32xf32> to vector<1x32xf32>
    %cst_90 = arith.constant 2.500000e-01 : f32
    %382 = vector.broadcast %cst_90 : f32 to vector<1x32xf32>
    %383 = arith.mulf %381, %382 : vector<1x32xf32>
    %384 = arith.mulf %17, %378 : vector<4x32xf32>
    %cst_91 = arith.constant 9.99999974E-6 : f32
    %385 = vector.broadcast %cst_91 : f32 to vector<1x32xf32>
    %386 = arith.addf %383, %385 : vector<1x32xf32>
    %387 = math.rsqrt %386 : vector<1x32xf32>
    %388 = vector.broadcast %387 : vector<1x32xf32> to vector<4x32xf32>
    %389 = arith.mulf %384, %388 : vector<4x32xf32>
    %390 = arith.addf %389, %20 : vector<4x32xf32>
    %391 = tpu.concatenate %371, %371 in 0 : vector<4x16xf32>, vector<4x16xf32> -> vector<8x16xf32>
    %cst_92 = arith.constant 0xFF800000 : f32
    %392 = vector.broadcast %cst_92 : f32 to vector<8x16xf32>
    %393 = arith.select %253, %391, %392 : vector<8x16xi1>, vector<8x16xf32>
    %cst_93 = arith.constant dense<0xFF800000> : vector<8xf32>
    %394 = vector.multi_reduction <maximumf>, %393, %cst_93 [1] : vector<8x16xf32> to vector<8xf32>
    %395 = vector.shape_cast %394 : vector<8xf32> to vector<8x1xf32>
    %396 = vector.broadcast %395 : vector<8x1xf32> to vector<8x16xf32>
    %397 = arith.cmpf oeq, %393, %396 : vector<8x16xf32>
    %c16_i32_94 = arith.constant 16 : i32
    %398 = vector.broadcast %c16_i32_94 : i32 to vector<8x16xi32>
    %399 = arith.select %397, %224, %398 : vector<8x16xi1>, vector<8x16xi32>
    %cst_95 = arith.constant dense<2147483647> : vector<8xi32>
    %400 = vector.multi_reduction <minsi>, %399, %cst_95 [1] : vector<8x16xi32> to vector<8xi32>
    %401 = vector.shape_cast %400 : vector<8xi32> to vector<8x1xi32>
    %402 = vector.broadcast %401 : vector<8x1xi32> to vector<8x16xi32>
    %403 = arith.cmpi eq, %224, %402 : vector<8x16xi32>
    %404 = arith.extui %403 : vector<8x16xi1> to vector<8x16xi32>
    %405 = arith.sitofp %404 : vector<8x16xi32> to vector<8x16xf32>
    %cst_96 = arith.constant dense<0xFF800000> : vector<16xf32>
    %406 = vector.multi_reduction <maximumf>, %405, %cst_96 [0] : vector<8x16xf32> to vector<16xf32>
    %407 = vector.shape_cast %406 : vector<16xf32> to vector<1x16xf32>
    %408 = vector.shape_cast %407 : vector<1x16xf32> to vector<1x16xf32>
    %409 = vector.broadcast %408 : vector<1x16xf32> to vector<4x16xf32>
    %410 = arith.select %259, %409, %371 : vector<4x16xi1>, vector<4x16xf32>
    %411 = tpu.concatenate %410, %390 in 1 : vector<4x16xf32>, vector<4x32xf32> -> vector<4x48xf32>
    %412 = arith.truncf %411 : vector<4x48xf32> to vector<4x48xbf16>
    %cst_97 = arith.constant dense<0.000000e+00> : vector<4x48xf32>
    %413 = tpu.matmul %412, %3, %cst_97 {dimension_numbers = #tpu.dot_dimension_numbers<[1], [0], [0], [1], [0, 0, 1, 1], [], []>} : vector<4x48xbf16>, vector<48x48xbf16>, vector<4x48xf32> -> vector<4x48xf32>
    %414 = vector.extract_strided_slice %413 {offsets = [0, 0], sizes = [4, 32], strides = [1, 1]} : vector<4x48xf32> to vector<4x32xf32>
    %415 = arith.addf %414, %14 : vector<4x32xf32>
    %416 = math.tanh %415 : vector<4x32xf32>
    %417 = vector.extract_strided_slice %413 {offsets = [0, 32], sizes = [4, 16], strides = [1, 1]} : vector<4x48xf32> to vector<4x16xf32>
    %418 = arith.truncf %416 : vector<4x32xf32> to vector<4x32xbf16>
    %cst_98 = arith.constant dense<0.000000e+00> : vector<4x16xf32>
    %419 = tpu.matmul %418, %4, %cst_98 {dimension_numbers = #tpu.dot_dimension_numbers<[1], [0], [0], [1], [0, 0, 1, 1], [], []>} : vector<4x32xbf16>, vector<32x16xbf16>, vector<4x16xf32> -> vector<4x16xf32>
    %420 = arith.addf %417, %419 : vector<4x16xf32>
    %421 = arith.addf %420, %23 : vector<4x16xf32>
    %422 = arith.addf %416, %390 : vector<4x32xf32>
    %cst_99 = arith.constant dense<0.000000e+00> : vector<32xf32>
    %423 = vector.multi_reduction <add>, %422, %cst_99 [0] : vector<4x32xf32> to vector<32xf32>
    %424 = vector.shape_cast %423 : vector<32xf32> to vector<1x32xf32>
    %cst_100 = arith.constant 2.500000e-01 : f32
    %425 = vector.broadcast %cst_100 : f32 to vector<1x32xf32>
    %426 = arith.mulf %424, %425 : vector<1x32xf32>
    %427 = vector.broadcast %426 : vector<1x32xf32> to vector<4x32xf32>
    %428 = arith.subf %422, %427 : vector<4x32xf32>
    %429 = arith.mulf %428, %428 : vector<4x32xf32>
    %cst_101 = arith.constant dense<0.000000e+00> : vector<32xf32>
    %430 = vector.multi_reduction <add>, %429, %cst_101 [0] : vector<4x32xf32> to vector<32xf32>
    %431 = vector.shape_cast %430 : vector<32xf32> to vector<1x32xf32>
    %cst_102 = arith.constant 2.500000e-01 : f32
    %432 = vector.broadcast %cst_102 : f32 to vector<1x32xf32>
    %433 = arith.mulf %431, %432 : vector<1x32xf32>
    %434 = arith.mulf %17, %428 : vector<4x32xf32>
    %cst_103 = arith.constant 9.99999974E-6 : f32
    %435 = vector.broadcast %cst_103 : f32 to vector<1x32xf32>
    %436 = arith.addf %433, %435 : vector<1x32xf32>
    %437 = math.rsqrt %436 : vector<1x32xf32>
    %438 = vector.broadcast %437 : vector<1x32xf32> to vector<4x32xf32>
    %439 = arith.mulf %434, %438 : vector<4x32xf32>
    %440 = arith.addf %439, %20 : vector<4x32xf32>
    %441 = tpu.concatenate %421, %421 in 0 : vector<4x16xf32>, vector<4x16xf32> -> vector<8x16xf32>
    %cst_104 = arith.constant 0xFF800000 : f32
    %442 = vector.broadcast %cst_104 : f32 to vector<8x16xf32>
    %443 = arith.select %253, %441, %442 : vector<8x16xi1>, vector<8x16xf32>
    %cst_105 = arith.constant dense<0xFF800000> : vector<8xf32>
    %444 = vector.multi_reduction <maximumf>, %443, %cst_105 [1] : vector<8x16xf32> to vector<8xf32>
    %445 = vector.shape_cast %444 : vector<8xf32> to vector<8x1xf32>
    %446 = vector.broadcast %445 : vector<8x1xf32> to vector<8x16xf32>
    %447 = arith.cmpf oeq, %443, %446 : vector<8x16xf32>
    %c16_i32_106 = arith.constant 16 : i32
    %448 = vector.broadcast %c16_i32_106 : i32 to vector<8x16xi32>
    %449 = arith.select %447, %224, %448 : vector<8x16xi1>, vector<8x16xi32>
    %cst_107 = arith.constant dense<2147483647> : vector<8xi32>
    %450 = vector.multi_reduction <minsi>, %449, %cst_107 [1] : vector<8x16xi32> to vector<8xi32>
    %451 = vector.shape_cast %450 : vector<8xi32> to vector<8x1xi32>
    %452 = vector.broadcast %451 : vector<8x1xi32> to vector<8x16xi32>
    %453 = arith.cmpi eq, %224, %452 : vector<8x16xi32>
    %454 = arith.extui %453 : vector<8x16xi1> to vector<8x16xi32>
    %455 = arith.sitofp %454 : vector<8x16xi32> to vector<8x16xf32>
    %cst_108 = arith.constant dense<0xFF800000> : vector<16xf32>
    %456 = vector.multi_reduction <maximumf>, %455, %cst_108 [0] : vector<8x16xf32> to vector<16xf32>
    %457 = vector.shape_cast %456 : vector<16xf32> to vector<1x16xf32>
    %458 = vector.shape_cast %457 : vector<1x16xf32> to vector<1x16xf32>
    %459 = vector.broadcast %458 : vector<1x16xf32> to vector<4x16xf32>
    %460 = arith.select %259, %459, %421 : vector<4x16xi1>, vector<4x16xf32>
    %461 = tpu.concatenate %460, %440 in 1 : vector<4x16xf32>, vector<4x32xf32> -> vector<4x48xf32>
    %462 = arith.truncf %461 : vector<4x48xf32> to vector<4x48xbf16>
    %cst_109 = arith.constant dense<0.000000e+00> : vector<4x48xf32>
    %463 = tpu.matmul %462, %3, %cst_109 {dimension_numbers = #tpu.dot_dimension_numbers<[1], [0], [0], [1], [0, 0, 1, 1], [], []>} : vector<4x48xbf16>, vector<48x48xbf16>, vector<4x48xf32> -> vector<4x48xf32>
    %464 = vector.extract_strided_slice %463 {offsets = [0, 0], sizes = [4, 32], strides = [1, 1]} : vector<4x48xf32> to vector<4x32xf32>
    %465 = arith.addf %464, %14 : vector<4x32xf32>
    %466 = math.tanh %465 : vector<4x32xf32>
    %467 = vector.extract_strided_slice %463 {offsets = [0, 32], sizes = [4, 16], strides = [1, 1]} : vector<4x48xf32> to vector<4x16xf32>
    %468 = arith.truncf %466 : vector<4x32xf32> to vector<4x32xbf16>
    %cst_110 = arith.constant dense<0.000000e+00> : vector<4x16xf32>
    %469 = tpu.matmul %468, %4, %cst_110 {dimension_numbers = #tpu.dot_dimension_numbers<[1], [0], [0], [1], [0, 0, 1, 1], [], []>} : vector<4x32xbf16>, vector<32x16xbf16>, vector<4x16xf32> -> vector<4x16xf32>
    %470 = arith.addf %467, %469 : vector<4x16xf32>
    %471 = arith.addf %470, %23 : vector<4x16xf32>
    %472 = arith.addf %466, %440 : vector<4x32xf32>
    %cst_111 = arith.constant dense<0.000000e+00> : vector<32xf32>
    %473 = vector.multi_reduction <add>, %472, %cst_111 [0] : vector<4x32xf32> to vector<32xf32>
    %474 = vector.shape_cast %473 : vector<32xf32> to vector<1x32xf32>
    %cst_112 = arith.constant 2.500000e-01 : f32
    %475 = vector.broadcast %cst_112 : f32 to vector<1x32xf32>
    %476 = arith.mulf %474, %475 : vector<1x32xf32>
    %477 = vector.broadcast %476 : vector<1x32xf32> to vector<4x32xf32>
    %478 = arith.subf %472, %477 : vector<4x32xf32>
    %479 = arith.mulf %478, %478 : vector<4x32xf32>
    %cst_113 = arith.constant dense<0.000000e+00> : vector<32xf32>
    %480 = vector.multi_reduction <add>, %479, %cst_113 [0] : vector<4x32xf32> to vector<32xf32>
    %481 = vector.shape_cast %480 : vector<32xf32> to vector<1x32xf32>
    %cst_114 = arith.constant 2.500000e-01 : f32
    %482 = vector.broadcast %cst_114 : f32 to vector<1x32xf32>
    %483 = arith.mulf %481, %482 : vector<1x32xf32>
    %484 = arith.mulf %17, %478 : vector<4x32xf32>
    %cst_115 = arith.constant 9.99999974E-6 : f32
    %485 = vector.broadcast %cst_115 : f32 to vector<1x32xf32>
    %486 = arith.addf %483, %485 : vector<1x32xf32>
    %487 = math.rsqrt %486 : vector<1x32xf32>
    %488 = vector.broadcast %487 : vector<1x32xf32> to vector<4x32xf32>
    %489 = arith.mulf %484, %488 : vector<4x32xf32>
    %490 = arith.addf %489, %20 : vector<4x32xf32>
    %491 = tpu.concatenate %471, %471 in 0 : vector<4x16xf32>, vector<4x16xf32> -> vector<8x16xf32>
    %cst_116 = arith.constant 0xFF800000 : f32
    %492 = vector.broadcast %cst_116 : f32 to vector<8x16xf32>
    %493 = arith.select %253, %491, %492 : vector<8x16xi1>, vector<8x16xf32>
    %cst_117 = arith.constant dense<0xFF800000> : vector<8xf32>
    %494 = vector.multi_reduction <maximumf>, %493, %cst_117 [1] : vector<8x16xf32> to vector<8xf32>
    %495 = vector.shape_cast %494 : vector<8xf32> to vector<8x1xf32>
    %496 = vector.broadcast %495 : vector<8x1xf32> to vector<8x16xf32>
    %497 = arith.cmpf oeq, %493, %496 : vector<8x16xf32>
    %c16_i32_118 = arith.constant 16 : i32
    %498 = vector.broadcast %c16_i32_118 : i32 to vector<8x16xi32>
    %499 = arith.select %497, %224, %498 : vector<8x16xi1>, vector<8x16xi32>
    %cst_119 = arith.constant dense<2147483647> : vector<8xi32>
    %500 = vector.multi_reduction <minsi>, %499, %cst_119 [1] : vector<8x16xi32> to vector<8xi32>
    %501 = vector.shape_cast %500 : vector<8xi32> to vector<8x1xi32>
    %502 = vector.broadcast %501 : vector<8x1xi32> to vector<8x16xi32>
    %503 = arith.cmpi eq, %224, %502 : vector<8x16xi32>
    %504 = arith.extui %503 : vector<8x16xi1> to vector<8x16xi32>
    %505 = arith.sitofp %504 : vector<8x16xi32> to vector<8x16xf32>
    %cst_120 = arith.constant dense<0xFF800000> : vector<16xf32>
    %506 = vector.multi_reduction <maximumf>, %505, %cst_120 [0] : vector<8x16xf32> to vector<16xf32>
    %507 = vector.shape_cast %506 : vector<16xf32> to vector<1x16xf32>
    %508 = vector.shape_cast %507 : vector<1x16xf32> to vector<1x16xf32>
    %509 = vector.broadcast %508 : vector<1x16xf32> to vector<4x16xf32>
    %510 = arith.select %259, %509, %471 : vector<4x16xi1>, vector<4x16xf32>
    %511 = tpu.concatenate %510, %490 in 1 : vector<4x16xf32>, vector<4x32xf32> -> vector<4x48xf32>
    %512 = arith.truncf %511 : vector<4x48xf32> to vector<4x48xbf16>
    %cst_121 = arith.constant dense<0.000000e+00> : vector<4x48xf32>
    %513 = tpu.matmul %512, %3, %cst_121 {dimension_numbers = #tpu.dot_dimension_numbers<[1], [0], [0], [1], [0, 0, 1, 1], [], []>} : vector<4x48xbf16>, vector<48x48xbf16>, vector<4x48xf32> -> vector<4x48xf32>
    %514 = vector.extract_strided_slice %513 {offsets = [0, 0], sizes = [4, 32], strides = [1, 1]} : vector<4x48xf32> to vector<4x32xf32>
    %515 = arith.addf %514, %14 : vector<4x32xf32>
    %516 = math.tanh %515 : vector<4x32xf32>
    %517 = vector.extract_strided_slice %513 {offsets = [0, 32], sizes = [4, 16], strides = [1, 1]} : vector<4x48xf32> to vector<4x16xf32>
    %518 = arith.truncf %516 : vector<4x32xf32> to vector<4x32xbf16>
    %cst_122 = arith.constant dense<0.000000e+00> : vector<4x16xf32>
    %519 = tpu.matmul %518, %4, %cst_122 {dimension_numbers = #tpu.dot_dimension_numbers<[1], [0], [0], [1], [0, 0, 1, 1], [], []>} : vector<4x32xbf16>, vector<32x16xbf16>, vector<4x16xf32> -> vector<4x16xf32>
    %520 = arith.addf %517, %519 : vector<4x16xf32>
    %521 = arith.addf %520, %23 : vector<4x16xf32>
    %522 = arith.addf %516, %490 : vector<4x32xf32>
    %cst_123 = arith.constant dense<0.000000e+00> : vector<32xf32>
    %523 = vector.multi_reduction <add>, %522, %cst_123 [0] : vector<4x32xf32> to vector<32xf32>
    %524 = vector.shape_cast %523 : vector<32xf32> to vector<1x32xf32>
    %cst_124 = arith.constant 2.500000e-01 : f32
    %525 = vector.broadcast %cst_124 : f32 to vector<1x32xf32>
    %526 = arith.mulf %524, %525 : vector<1x32xf32>
    %527 = vector.broadcast %526 : vector<1x32xf32> to vector<4x32xf32>
    %528 = arith.subf %522, %527 : vector<4x32xf32>
    %529 = arith.mulf %528, %528 : vector<4x32xf32>
    %cst_125 = arith.constant dense<0.000000e+00> : vector<32xf32>
    %530 = vector.multi_reduction <add>, %529, %cst_125 [0] : vector<4x32xf32> to vector<32xf32>
    %531 = vector.shape_cast %530 : vector<32xf32> to vector<1x32xf32>
    %cst_126 = arith.constant 2.500000e-01 : f32
    %532 = vector.broadcast %cst_126 : f32 to vector<1x32xf32>
    %533 = arith.mulf %531, %532 : vector<1x32xf32>
    %534 = arith.mulf %17, %528 : vector<4x32xf32>
    %cst_127 = arith.constant 9.99999974E-6 : f32
    %535 = vector.broadcast %cst_127 : f32 to vector<1x32xf32>
    %536 = arith.addf %533, %535 : vector<1x32xf32>
    %537 = math.rsqrt %536 : vector<1x32xf32>
    %538 = vector.broadcast %537 : vector<1x32xf32> to vector<4x32xf32>
    %539 = arith.mulf %534, %538 : vector<4x32xf32>
    %540 = arith.addf %539, %20 : vector<4x32xf32>
    %541 = tpu.concatenate %521, %521 in 0 : vector<4x16xf32>, vector<4x16xf32> -> vector<8x16xf32>
    %cst_128 = arith.constant 0xFF800000 : f32
    %542 = vector.broadcast %cst_128 : f32 to vector<8x16xf32>
    %543 = arith.select %253, %541, %542 : vector<8x16xi1>, vector<8x16xf32>
    %cst_129 = arith.constant dense<0xFF800000> : vector<8xf32>
    %544 = vector.multi_reduction <maximumf>, %543, %cst_129 [1] : vector<8x16xf32> to vector<8xf32>
    %545 = vector.shape_cast %544 : vector<8xf32> to vector<8x1xf32>
    %546 = vector.broadcast %545 : vector<8x1xf32> to vector<8x16xf32>
    %547 = arith.cmpf oeq, %543, %546 : vector<8x16xf32>
    %c16_i32_130 = arith.constant 16 : i32
    %548 = vector.broadcast %c16_i32_130 : i32 to vector<8x16xi32>
    %549 = arith.select %547, %224, %548 : vector<8x16xi1>, vector<8x16xi32>
    %cst_131 = arith.constant dense<2147483647> : vector<8xi32>
    %550 = vector.multi_reduction <minsi>, %549, %cst_131 [1] : vector<8x16xi32> to vector<8xi32>
    %551 = vector.shape_cast %550 : vector<8xi32> to vector<8x1xi32>
    %552 = vector.broadcast %551 : vector<8x1xi32> to vector<8x16xi32>
    %553 = arith.cmpi eq, %224, %552 : vector<8x16xi32>
    %554 = arith.extui %553 : vector<8x16xi1> to vector<8x16xi32>
    %555 = arith.sitofp %554 : vector<8x16xi32> to vector<8x16xf32>
    %cst_132 = arith.constant dense<0xFF800000> : vector<16xf32>
    %556 = vector.multi_reduction <maximumf>, %555, %cst_132 [0] : vector<8x16xf32> to vector<16xf32>
    %557 = vector.shape_cast %556 : vector<16xf32> to vector<1x16xf32>
    %558 = vector.shape_cast %557 : vector<1x16xf32> to vector<1x16xf32>
    %559 = vector.broadcast %558 : vector<1x16xf32> to vector<4x16xf32>
    %560 = arith.select %259, %559, %521 : vector<4x16xi1>, vector<4x16xf32>
    %561 = tpu.concatenate %560, %540 in 1 : vector<4x16xf32>, vector<4x32xf32> -> vector<4x48xf32>
    %562 = arith.truncf %561 : vector<4x48xf32> to vector<4x48xbf16>
    %cst_133 = arith.constant dense<0.000000e+00> : vector<4x48xf32>
    %563 = tpu.matmul %562, %3, %cst_133 {dimension_numbers = #tpu.dot_dimension_numbers<[1], [0], [0], [1], [0, 0, 1, 1], [], []>} : vector<4x48xbf16>, vector<48x48xbf16>, vector<4x48xf32> -> vector<4x48xf32>
    %564 = vector.extract_strided_slice %563 {offsets = [0, 0], sizes = [4, 32], strides = [1, 1]} : vector<4x48xf32> to vector<4x32xf32>
    %565 = arith.addf %564, %14 : vector<4x32xf32>
    %566 = math.tanh %565 : vector<4x32xf32>
    %567 = vector.extract_strided_slice %563 {offsets = [0, 32], sizes = [4, 16], strides = [1, 1]} : vector<4x48xf32> to vector<4x16xf32>
    %568 = arith.truncf %566 : vector<4x32xf32> to vector<4x32xbf16>
    %cst_134 = arith.constant dense<0.000000e+00> : vector<4x16xf32>
    %569 = tpu.matmul %568, %4, %cst_134 {dimension_numbers = #tpu.dot_dimension_numbers<[1], [0], [0], [1], [0, 0, 1, 1], [], []>} : vector<4x32xbf16>, vector<32x16xbf16>, vector<4x16xf32> -> vector<4x16xf32>
    %570 = arith.addf %567, %569 : vector<4x16xf32>
    %571 = arith.addf %570, %23 : vector<4x16xf32>
    %572 = arith.addf %566, %540 : vector<4x32xf32>
    %cst_135 = arith.constant dense<0.000000e+00> : vector<32xf32>
    %573 = vector.multi_reduction <add>, %572, %cst_135 [0] : vector<4x32xf32> to vector<32xf32>
    %574 = vector.shape_cast %573 : vector<32xf32> to vector<1x32xf32>
    %cst_136 = arith.constant 2.500000e-01 : f32
    %575 = vector.broadcast %cst_136 : f32 to vector<1x32xf32>
    %576 = arith.mulf %574, %575 : vector<1x32xf32>
    %577 = vector.broadcast %576 : vector<1x32xf32> to vector<4x32xf32>
    %578 = arith.subf %572, %577 : vector<4x32xf32>
    %579 = arith.mulf %578, %578 : vector<4x32xf32>
    %cst_137 = arith.constant dense<0.000000e+00> : vector<32xf32>
    %580 = vector.multi_reduction <add>, %579, %cst_137 [0] : vector<4x32xf32> to vector<32xf32>
    %581 = vector.shape_cast %580 : vector<32xf32> to vector<1x32xf32>
    %cst_138 = arith.constant 2.500000e-01 : f32
    %582 = vector.broadcast %cst_138 : f32 to vector<1x32xf32>
    %583 = arith.mulf %581, %582 : vector<1x32xf32>
    %584 = arith.mulf %17, %578 : vector<4x32xf32>
    %cst_139 = arith.constant 9.99999974E-6 : f32
    %585 = vector.broadcast %cst_139 : f32 to vector<1x32xf32>
    %586 = arith.addf %583, %585 : vector<1x32xf32>
    %587 = math.rsqrt %586 : vector<1x32xf32>
    %588 = vector.broadcast %587 : vector<1x32xf32> to vector<4x32xf32>
    %589 = arith.mulf %584, %588 : vector<4x32xf32>
    %590 = arith.addf %589, %20 : vector<4x32xf32>
    %591 = tpu.concatenate %571, %571 in 0 : vector<4x16xf32>, vector<4x16xf32> -> vector<8x16xf32>
    %cst_140 = arith.constant 0xFF800000 : f32
    %592 = vector.broadcast %cst_140 : f32 to vector<8x16xf32>
    %593 = arith.select %253, %591, %592 : vector<8x16xi1>, vector<8x16xf32>
    %cst_141 = arith.constant dense<0xFF800000> : vector<8xf32>
    %594 = vector.multi_reduction <maximumf>, %593, %cst_141 [1] : vector<8x16xf32> to vector<8xf32>
    %595 = vector.shape_cast %594 : vector<8xf32> to vector<8x1xf32>
    %596 = vector.broadcast %595 : vector<8x1xf32> to vector<8x16xf32>
    %597 = arith.cmpf oeq, %593, %596 : vector<8x16xf32>
    %c16_i32_142 = arith.constant 16 : i32
    %598 = vector.broadcast %c16_i32_142 : i32 to vector<8x16xi32>
    %599 = arith.select %597, %224, %598 : vector<8x16xi1>, vector<8x16xi32>
    %cst_143 = arith.constant dense<2147483647> : vector<8xi32>
    %600 = vector.multi_reduction <minsi>, %599, %cst_143 [1] : vector<8x16xi32> to vector<8xi32>
    %601 = vector.shape_cast %600 : vector<8xi32> to vector<8x1xi32>
    %602 = vector.broadcast %601 : vector<8x1xi32> to vector<8x16xi32>
    %603 = arith.cmpi eq, %224, %602 : vector<8x16xi32>
    %604 = arith.extui %603 : vector<8x16xi1> to vector<8x16xi32>
    %605 = arith.sitofp %604 : vector<8x16xi32> to vector<8x16xf32>
    %cst_144 = arith.constant dense<0xFF800000> : vector<16xf32>
    %606 = vector.multi_reduction <maximumf>, %605, %cst_144 [0] : vector<8x16xf32> to vector<16xf32>
    %607 = vector.shape_cast %606 : vector<16xf32> to vector<1x16xf32>
    %608 = vector.shape_cast %607 : vector<1x16xf32> to vector<1x16xf32>
    %609 = vector.broadcast %608 : vector<1x16xf32> to vector<4x16xf32>
    %610 = arith.select %259, %609, %571 : vector<4x16xi1>, vector<4x16xf32>
    %611 = tpu.concatenate %610, %590 in 1 : vector<4x16xf32>, vector<4x32xf32> -> vector<4x48xf32>
    %612 = arith.truncf %611 : vector<4x48xf32> to vector<4x48xbf16>
    %cst_145 = arith.constant dense<0.000000e+00> : vector<4x48xf32>
    %613 = tpu.matmul %612, %3, %cst_145 {dimension_numbers = #tpu.dot_dimension_numbers<[1], [0], [0], [1], [0, 0, 1, 1], [], []>} : vector<4x48xbf16>, vector<48x48xbf16>, vector<4x48xf32> -> vector<4x48xf32>
    %614 = vector.extract_strided_slice %613 {offsets = [0, 0], sizes = [4, 32], strides = [1, 1]} : vector<4x48xf32> to vector<4x32xf32>
    %615 = arith.addf %614, %14 : vector<4x32xf32>
    %616 = math.tanh %615 : vector<4x32xf32>
    %617 = vector.extract_strided_slice %613 {offsets = [0, 32], sizes = [4, 16], strides = [1, 1]} : vector<4x48xf32> to vector<4x16xf32>
    %618 = arith.truncf %616 : vector<4x32xf32> to vector<4x32xbf16>
    %cst_146 = arith.constant dense<0.000000e+00> : vector<4x16xf32>
    %619 = tpu.matmul %618, %4, %cst_146 {dimension_numbers = #tpu.dot_dimension_numbers<[1], [0], [0], [1], [0, 0, 1, 1], [], []>} : vector<4x32xbf16>, vector<32x16xbf16>, vector<4x16xf32> -> vector<4x16xf32>
    %620 = arith.addf %617, %619 : vector<4x16xf32>
    %621 = arith.addf %620, %23 : vector<4x16xf32>
    %622 = tpu.concatenate %271, %321, %371, %421, %471, %521, %571, %621 in 1 : vector<4x16xf32>, vector<4x16xf32>, vector<4x16xf32>, vector<4x16xf32>, vector<4x16xf32>, vector<4x16xf32>, vector<4x16xf32>, vector<4x16xf32> -> vector<4x128xf32>
    %c0_147 = arith.constant 0 : index
    %c0_148 = arith.constant 0 : index
    %623 = vector.load %arg3[%c0_147, %c0_148] : memref<4x128xf32, #tpu.memory_space<vmem>>, vector<4x128xf32>
    tpu.vector_store %arg3[%c0_147, %c0_148], %622 {strides = array<i32>} : memref<4x128xf32, #tpu.memory_space<vmem>>, vector<4x128xf32>,
    return
  }
}

</mosaic_0001>

<llo_original>
// kernel: tpu_custom_call.1
$region0: #{tpu_custom_call.1}
  #allocation0 [shape = 'u32[]', space=smem, size = 0x4, offset = 0x4, fixed_abs, tag = 'smem constant byte address 0x4 - core index']
  #allocation1 [shape = 'u32[72,128]{1,0:T(1,128)}', space=vmem, size = 0x9000, scoped, tag = 'internal scratch']
  %s0 = inlined_call_operand.vmem [shape: bf16[32,16], index: 0, kind: input, shape index: {}]
  %s1 = inlined_call_operand.vmem [shape: bf16[128,48], index: 1, kind: input, shape index: {}]
  %s2 = inlined_call_operand.vmem [shape: f32[7,32], index: 2, kind: input, shape index: {}]
  %s3 = inlined_call_operand.hbm [shape: f32[4,128], index: 3, kind: output, shape index: {}]
  %s4 = sld [smem:[#allocation0]]
  $region22: #{tpu_custom_call.1} parent=0
    _
  %s6 = ssub.s32 1, %s4
  %s7 = scalar_select 0, %s6, %s4
  $region1: #{tpu_custom_call.1} parent=0
    #allocation2 [shape = 'u8[2048]{0}', space=vmem, size = 0x800, scoped, tag = 'output window, operand 0, single buffered']
    #allocation3 [shape = 's32[1]{0}', space=sflag, size = 0x4, scoped, tag = 'scoped memory for tpu_custom_call.1']
    %8 = vsyncpa [#allocation3], 0
    // Predicated region
    $region2: #{tpu_custom_call.1} parent=1 // pred_check
      _
    $region3: #{tpu_custom_call.1} parent=1 // pred_check_branch
      %10 = sbr.rel (0) target = $region5
    $region4: #{tpu_custom_call.1} parent=1 // pred_region
      _
    $region5: #{tpu_custom_call.1} parent=1 // pred_fallthru
      _
    // Predicated region
    $region6: #{tpu_custom_call.1} parent=1 // pred_check
      _
    $region7: #{tpu_custom_call.1} parent=1 // pred_check_branch
      %12 = sbr.rel (0) target = $region9
    $region8: #{tpu_custom_call.1} parent=1 // pred_region
      _
    $region9: #{tpu_custom_call.1} parent=1 // pred_fallthru
      _
    // Predicated region
    $region10: #{tpu_custom_call.1} parent=1 // pred_check
      _
    $region11: #{tpu_custom_call.1} parent=1 // pred_check_branch
      %14 = sbr.rel (0) target = $region13
    $region12: #{tpu_custom_call.1} parent=1 // pred_region
      _
    $region13: #{tpu_custom_call.1} parent=1 // pred_fallthru
      _
    %v16 = vld [vmem:[%s1] sm:$0xf]
    %v17 = vld [vmem:[%s1 + $0x4] sm:$0xf]
    %v18 = vld [vmem:[%s1 + $0x8] sm:$0xf]
    %v19 = vld [vmem:[%s1 + $0xc] sm:$0xf]
    %v20 = vld [vmem:[%s1 + $0x10] sm:$0xf]
    %v21 = vld [vmem:[%s1 + $0x14] sm:$0xf]
    %v22 = vld [vmem:[%s1 + $0x18] sm:$0xf]
    %v23 = vld [vmem:[%s1 + $0x1c] sm:$0xf]
    %v24 = vld [vmem:[%s1 + $0x20] sm:$0xf]
    %v25 = vld [vmem:[%s1 + $0x24] sm:$0xf]
    %v26 = vld [vmem:[%s1 + $0x28] sm:$0xf]
    %v27 = vld [vmem:[%s1 + $0x2c] sm:$0xf]
    %v28 = vld [vmem:[%s1 + $0x30] sm:$0xf]
    %v29 = vld [vmem:[%s1 + $0x34] sm:$0xf]
    %v30 = vld [vmem:[%s1 + $0x38] sm:$0xf]
    %v31 = vld [vmem:[%s1 + $0x3c] sm:$0xf]
    %v32 = vld [vmem:[%s2] sm:$0x7f]
    %v33 = vperm.slane %v32, 1
    %v34 = vperm.slane %v32, 2
    %v35 = vperm.slane %v32, 3
    %v36 = vperm.slane %v32, 4
    %v37 = vperm.slane %v32, 5
    %v38 = vperm.slane %v32, 6
    %v39 = vld [vmem:[%s0] sm:$0xf]
    %v40 = vld [vmem:[%s0 + $0x4] sm:$0xf]
    %v41 = vld [vmem:[%s0 + $0x8] sm:$0xf]
    %v42 = vld [vmem:[%s0 + $0xc] sm:$0xf]
    %v43 = vperm.slane %v32, 0
    %v48 = vunpack.c.l.b16 %v39
    %v49 = vunpack.c.l.b16 %v40
    %v50 = vunpack.c.l.b16 %v41
    %v51 = vunpack.c.l.b16 %v42
    %v52 = vpack.c.b16 %v49, %v48
    %v53 = vpack.c.b16 %v51, %v50
    %v56 = vunpack.c.l.b16 %v16
    %v57 = vunpack.c.l.b16 %v17
    %v58 = vpack.c.b16 %v57, %v56
    %vm60 = vcmask 130048
    %v62 = vsel %vm60, %v52, 0
    %v65 = vsel %vm60, %v53, 0
    %67 = vmatpush.bf16.msra.mxu0 0
    %68 = vmatpush.bf16.msra.mxu0 0
    %69 = vmatpush.bf16.msra.mxu0 0
    %70 = vmatpush.bf16.msra.mxu0 0
    %71 = vmatpush.bf16.msra.mxu0 0
    %72 = vmatpush.bf16.msra.mxu0 0
    %73 = vmatpush.bf16.msra.mxu0 0
    %74 = vmatpush.bf16.msra.mxu0 %v58
    %75 = vmatmul.bf16.gmra.mxu0 %v62
    %v76 = vpop.f32.mrf.mxu0
    %v77 = vadd.f32 %v43, %v76
    %v78 = vpop.f32.mrf.mxu0
    %v79 = vadd.f32 %v43, %v78
    %80 = vmatmul.bf16.gmra.mxu0 %v65
    %v81 = vpop.f32.mrf.mxu0
    %v82 = vadd.f32 %v43, %v81
    %v83 = vpop.f32.mrf.mxu0
    %v84 = vadd.f32 %v43, %v83
    %85 = vdwg.mxu0
    %v90 = vunpack.c.l.b16 %v18
    %v91 = vunpack.c.l.b16 %v19
    %v92 = vunpack.c.l.b16 %v20
    %v93 = vunpack.c.l.b16 %v21
    %v94 = vpack.c.b16 %v91, %v90
    %v95 = vpack.c.b16 %v93, %v92
    %vm98 = vcmask 261120
    %v100 = vsel %vm98, 0, 0
    %102 = vmatpush.bf16.msra.mxu0 0
    %103 = vmatpush.bf16.msra.mxu0 0
    %104 = vmatpush.bf16.msra.mxu0 0
    %105 = vmatpush.bf16.msra.mxu0 0
    %106 = vmatpush.bf16.msra.mxu0 0
    %107 = vmatpush.bf16.msra.mxu0 0
    %108 = vmatpush.bf16.msra.mxu0 %v95
    %109 = vmatpush.bf16.msra.mxu0 %v94
    %110 = vmatmul.bf16.gmra.mxu0 %v100
    %v111 = vpop.f32.mrf.mxu0
    %v112 = vadd.f32 0.0, %v111
    %v113 = vpop.f32.mrf.mxu0
    %114 = vdwg.mxu0
    %v115 = vadd.f32 %v77, %v112
    %v116 = vtanh.pop %v115
    %v117 = vadd.f32 %v116, 0.0
    %vm118 = vcmask 257024
    %v119 = vsel %vm118, %v117, 0.0
    %v120 = vrot.slane %v119, 4
    %v121 = vadd.f32 %v119, %v120
    %v122 = vrot.slane %v121, 2
    %v123 = vadd.f32 %v121, %v122
    %v124 = vrot.slane %v123, 1
    %v125 = vadd.f32 %v123, %v124
    %v126 = vmul.f32 %v125, 0.25
    %v127 = vsub.f32 %v117, %v126
    %v128 = vmul.f32 %v127, %v127
    %v129 = vsel %vm118, %v128, 0.0
    %v130 = vrot.slane %v129, 4
    %v131 = vadd.f32 %v129, %v130
    %v132 = vrot.slane %v131, 2
    %v133 = vadd.f32 %v131, %v132
    %v134 = vrot.slane %v133, 1
    %v135 = vadd.f32 %v133, %v134
    %v136 = vmul.f32 %v135, 0.25
    %v137 = vmul.f32 %v33, %v127
    %v138 = vadd.f32 %v136, 1e-05
    %v139 = vrsqrt.pop %v138
    %v140 = vmul.f32 %v139, %v138
    %v141 = vmul.f32 %v140, %v139
    %v142 = vmul.f32 0.5, %v141
    %v143 = vsub.f32 1.5, %v142
    %v144 = vmul.f32 %v139, %v143
    %vm145 = vweird.f32 %v138
    %vm146 = vweird.f32 %v139
    %vm147 = vmor %vm145, %vm146
    %v148 = vsel %vm147, %v139, %v144
    %v149 = vmul.f32 %v137, %v148
    %v150 = vadd.f32 %v149, %v34
    %v151 = vpack.c.bf16 %v150, %v150
    %v153 = vsel %vm98, %v151, 0
    %155 = vmatpush.bf16.msra.mxu0 0
    %156 = vmatpush.bf16.msra.mxu0 0
    %157 = vmatpush.bf16.msra.mxu0 0
    %158 = vmatpush.bf16.msra.mxu0 0
    %159 = vmatpush.bf16.msra.mxu0 0
    %160 = vmatpush.bf16.msra.mxu0 0
    %161 = vmatpush.bf16.msra.mxu0 %v95
    %162 = vmatpush.bf16.msra.mxu0 %v94
    %163 = vmatmul.bf16.gmra.mxu0 %v153
    %v164 = vpop.f32.mrf.mxu0
    %v165 = vadd.f32 0.0, %v164
    %v166 = vpop.f32.mrf.mxu0
    %167 = vdwg.mxu0
    %v169 = vrot.slane %v165, 4
    %v171 = vadd.f32 %v77, %v169
    %v172 = vtanh.pop %v171
    %v174 = vrot.slane %v150, 4
    %v176 = vadd.f32 %v172, %v174
    %v178 = vrot.slane %v176, 4
    %v180 = vsel %vm118, %v178, 0.0
    %v181 = vrot.slane %v180, 4
    %v182 = vadd.f32 %v180, %v181
    %v183 = vrot.slane %v182, 2
    %v184 = vadd.f32 %v182, %v183
    %v185 = vrot.slane %v184, 1
    %v186 = vadd.f32 %v184, %v185
    %v187 = vmul.f32 %v186, 0.25
    %v188 = vsub.f32 %v176, %v187
    %v189 = vmul.f32 %v188, %v188
    %v191 = vrot.slane %v189, 4
    %v193 = vsel %vm118, %v191, 0.0
    %v194 = vrot.slane %v193, 4
    %v195 = vadd.f32 %v193, %v194
    %v196 = vrot.slane %v195, 2
    %v197 = vadd.f32 %v195, %v196
    %v198 = vrot.slane %v197, 1
    %v199 = vadd.f32 %v197, %v198
    %v200 = vmul.f32 %v199, 0.25
    %v201 = vmul.f32 %v33, %v188
    %v202 = vadd.f32 %v200, 1e-05
    %v203 = vrsqrt.pop %v202
    %v204 = vmul.f32 %v203, %v202
    %v205 = vmul.f32 %v204, %v203
    %v206 = vmul.f32 0.5, %v205
    %v207 = vsub.f32 1.5, %v206
    %v208 = vmul.f32 %v203, %v207
    %vm209 = vweird.f32 %v202
    %vm210 = vweird.f32 %v203
    %vm211 = vmor %vm209, %vm210
    %v212 = vsel %vm211, %v203, %v208
    %v213 = vmul.f32 %v201, %v212
    %v214 = vadd.f32 %v213, %v34
    %v215 = vpack.c.bf16 %v214, %v214
    %v217 = vrot.slane %v215, 2
    %v219 = vsel %vm98, %v217, 0
    %221 = vmatpush.bf16.msra.mxu0 0
    %222 = vmatpush.bf16.msra.mxu0 0
    %223 = vmatpush.bf16.msra.mxu0 0
    %224 = vmatpush.bf16.msra.mxu0 0
    %225 = vmatpush.bf16.msra.mxu0 0
    %226 = vmatpush.bf16.msra.mxu0 0
    %227 = vmatpush.bf16.msra.mxu0 %v95
    %228 = vmatpush.bf16.msra.mxu0 %v94
    %229 = vmatmul.bf16.gmra.mxu0 %v219
    %v230 = vpop.f32.mrf.mxu0
    %v231 = vadd.f32 0.0, %v230
    %v232 = vpop.f32.mrf.mxu0
    %233 = vdwg.mxu0
    %v234 = vadd.f32 %v79, %v231
    %v235 = vtanh.pop %v234
    %v237 = vrot.slane %v214, 4
    %v239 = vadd.f32 %v235, %v237
    %v240 = vsel %vm118, %v239, 0.0
    %v241 = vrot.slane %v240, 4
    %v242 = vadd.f32 %v240, %v241
    %v243 = vrot.slane %v242, 2
    %v244 = vadd.f32 %v242, %v243
    %v245 = vrot.slane %v244, 1
    %v246 = vadd.f32 %v244, %v245
    %v247 = vmul.f32 %v246, 0.25
    %v248 = vsub.f32 %v239, %v247
    %v249 = vmul.f32 %v248, %v248
    %v250 = vsel %vm118, %v249, 0.0
    %v251 = vrot.slane %v250, 4
    %v252 = vadd.f32 %v250, %v251
    %v253 = vrot.slane %v252, 2
    %v254 = vadd.f32 %v252, %v253
    %v255 = vrot.slane %v254, 1
    %v256 = vadd.f32 %v254, %v255
    %v257 = vmul.f32 %v256, 0.25
    %v258 = vmul.f32 %v33, %v248
    %v259 = vadd.f32 %v257, 1e-05
    %v260 = vrsqrt.pop %v259
    %v261 = vmul.f32 %v260, %v259
    %v262 = vmul.f32 %v261, %v260
    %v263 = vmul.f32 0.5, %v262
    %v264 = vsub.f32 1.5, %v263
    %v265 = vmul.f32 %v260, %v264
    %vm266 = vweird.f32 %v259
    %vm267 = vweird.f32 %v260
    %vm268 = vmor %vm266, %vm267
    %v269 = vsel %vm268, %v260, %v265
    %v270 = vmul.f32 %v258, %v269
    %v271 = vadd.f32 %v270, %v34
    %v272 = vpack.c.bf16 %v271, %v271
    %v274 = vsel %vm98, %v272, 0
    %276 = vmatpush.bf16.msra.mxu0 0
    %277 = vmatpush.bf16.msra.mxu0 0
    %278 = vmatpush.bf16.msra.mxu0 0
    %279 = vmatpush.bf16.msra.mxu0 0
    %280 = vmatpush.bf16.msra.mxu0 0
    %281 = vmatpush.bf16.msra.mxu0 0
    %282 = vmatpush.bf16.msra.mxu0 %v95
    %283 = vmatpush.bf16.msra.mxu0 %v94
    %284 = vmatmul.bf16.gmra.mxu0 %v274
    %v285 = vpop.f32.mrf.mxu0
    %v286 = vadd.f32 0.0, %v285
    %v287 = vpop.f32.mrf.mxu0
    %288 = vdwg.mxu0
    %v290 = vrot.slane %v286, 4
    %v292 = vadd.f32 %v79, %v290
    %v293 = vtanh.pop %v292
    %v295 = vrot.slane %v271, 4
    %v297 = vadd.f32 %v293, %v295
    %v299 = vrot.slane %v297, 4
    %v301 = vsel %vm118, %v299, 0.0
    %v302 = vrot.slane %v301, 4
    %v303 = vadd.f32 %v301, %v302
    %v304 = vrot.slane %v303, 2
    %v305 = vadd.f32 %v303, %v304
    %v306 = vrot.slane %v305, 1
    %v307 = vadd.f32 %v305, %v306
    %v308 = vmul.f32 %v307, 0.25
    %v309 = vsub.f32 %v297, %v308
    %v310 = vmul.f32 %v309, %v309
    %v312 = vrot.slane %v310, 4
    %v314 = vsel %vm118, %v312, 0.0
    %v315 = vrot.slane %v314, 4
    %v316 = vadd.f32 %v314, %v315
    %v317 = vrot.slane %v316, 2
    %v318 = vadd.f32 %v316, %v317
    %v319 = vrot.slane %v318, 1
    %v320 = vadd.f32 %v318, %v319
    %v321 = vmul.f32 %v320, 0.25
    %v322 = vmul.f32 %v33, %v309
    %v323 = vadd.f32 %v321, 1e-05
    %v324 = vrsqrt.pop %v323
    %v325 = vmul.f32 %v324, %v323
    %v326 = vmul.f32 %v325, %v324
    %v327 = vmul.f32 0.5, %v326
    %v328 = vsub.f32 1.5, %v327
    %v329 = vmul.f32 %v324, %v328
    %vm330 = vweird.f32 %v323
    %vm331 = vweird.f32 %v324
    %vm332 = vmor %vm330, %vm331
    %v333 = vsel %vm332, %v324, %v329
    %v334 = vmul.f32 %v322, %v333
    %v335 = vadd.f32 %v334, %v34
    %v336 = vpack.c.bf16 %v335, %v335
    %v338 = vrot.slane %v336, 2
    %v340 = vsel %vm98, %v338, 0
    %342 = vmatpush.bf16.msra.mxu0 0
    %343 = vmatpush.bf16.msra.mxu0 0
    %344 = vmatpush.bf16.msra.mxu0 0
    %345 = vmatpush.bf16.msra.mxu0 0
    %346 = vmatpush.bf16.msra.mxu0 0
    %347 = vmatpush.bf16.msra.mxu0 0
    %348 = vmatpush.bf16.msra.mxu0 %v95
    %349 = vmatpush.bf16.msra.mxu0 %v94
    %350 = vmatmul.bf16.gmra.mxu0 %v340
    %v351 = vpop.f32.mrf.mxu0
    %v352 = vadd.f32 0.0, %v351
    %v353 = vpop.f32.mrf.mxu0
    %354 = vdwg.mxu0
    %v355 = vadd.f32 %v82, %v352
    %v356 = vtanh.pop %v355
    %v358 = vrot.slane %v335, 4
    %v360 = vadd.f32 %v356, %v358
    %v361 = vsel %vm118, %v360, 0.0
    %v362 = vrot.slane %v361, 4
    %v363 = vadd.f32 %v361, %v362
    %v364 = vrot.slane %v363, 2
    %v365 = vadd.f32 %v363, %v364
    %v366 = vrot.slane %v365, 1
    %v367 = vadd.f32 %v365, %v366
    %v368 = vmul.f32 %v367, 0.25
    %v369 = vsub.f32 %v360, %v368
    %v370 = vmul.f32 %v369, %v369
    %v371 = vsel %vm118, %v370, 0.0
    %v372 = vrot.slane %v371, 4
    %v373 = vadd.f32 %v371, %v372
    %v374 = vrot.slane %v373, 2
    %v375 = vadd.f32 %v373, %v374
    %v376 = vrot.slane %v375, 1
    %v377 = vadd.f32 %v375, %v376
    %v378 = vmul.f32 %v377, 0.25
    %v379 = vmul.f32 %v33, %v369
    %v380 = vadd.f32 %v378, 1e-05
    %v381 = vrsqrt.pop %v380
    %v382 = vmul.f32 %v381, %v380
    %v383 = vmul.f32 %v382, %v381
    %v384 = vmul.f32 0.5, %v383
    %v385 = vsub.f32 1.5, %v384
    %v386 = vmul.f32 %v381, %v385
    %vm387 = vweird.f32 %v380
    %vm388 = vweird.f32 %v381
    %vm389 = vmor %vm387, %vm388
    %v390 = vsel %vm389, %v381, %v386
    %v391 = vmul.f32 %v379, %v390
    %v392 = vadd.f32 %v391, %v34
    %v393 = vpack.c.bf16 %v392, %v392
    %v395 = vsel %vm98, %v393, 0
    %397 = vmatpush.bf16.msra.mxu0 0
    %398 = vmatpush.bf16.msra.mxu0 0
    %399 = vmatpush.bf16.msra.mxu0 0
    %400 = vmatpush.bf16.msra.mxu0 0
    %401 = vmatpush.bf16.msra.mxu0 0
    %402 = vmatpush.bf16.msra.mxu0 0
    %403 = vmatpush.bf16.msra.mxu0 %v95
    %404 = vmatpush.bf16.msra.mxu0 %v94
    %405 = vmatmul.bf16.gmra.mxu0 %v395
    %v406 = vpop.f32.mrf.mxu0
    %v407 = vadd.f32 0.0, %v406
    %v408 = vpop.f32.mrf.mxu0
    %409 = vdwg.mxu0
    %v411 = vrot.slane %v407, 4
    %v413 = vadd.f32 %v82, %v411
    %v414 = vtanh.pop %v413
    %v416 = vrot.slane %v392, 4
    %v418 = vadd.f32 %v414, %v416
    %v420 = vrot.slane %v418, 4
    %v422 = vsel %vm118, %v420, 0.0
    %v423 = vrot.slane %v422, 4
    %v424 = vadd.f32 %v422, %v423
    %v425 = vrot.slane %v424, 2
    %v426 = vadd.f32 %v424, %v425
    %v427 = vrot.slane %v426, 1
    %v428 = vadd.f32 %v426, %v427
    %v429 = vmul.f32 %v428, 0.25
    %v430 = vsub.f32 %v418, %v429
    %v431 = vmul.f32 %v430, %v430
    %v433 = vrot.slane %v431, 4
    %v435 = vsel %vm118, %v433, 0.0
    %v436 = vrot.slane %v435, 4
    %v437 = vadd.f32 %v435, %v436
    %v438 = vrot.slane %v437, 2
    %v439 = vadd.f32 %v437, %v438
    %v440 = vrot.slane %v439, 1
    %v441 = vadd.f32 %v439, %v440
    %v442 = vmul.f32 %v441, 0.25
    %v443 = vmul.f32 %v33, %v430
    %v444 = vadd.f32 %v442, 1e-05
    %v445 = vrsqrt.pop %v444
    %v446 = vmul.f32 %v445, %v444
    %v447 = vmul.f32 %v446, %v445
    %v448 = vmul.f32 0.5, %v447
    %v449 = vsub.f32 1.5, %v448
    %v450 = vmul.f32 %v445, %v449
    %vm451 = vweird.f32 %v444
    %vm452 = vweird.f32 %v445
    %vm453 = vmor %vm451, %vm452
    %v454 = vsel %vm453, %v445, %v450
    %v455 = vmul.f32 %v443, %v454
    %v456 = vadd.f32 %v455, %v34
    %v457 = vpack.c.bf16 %v456, %v456
    %v459 = vrot.slane %v457, 2
    %v461 = vsel %vm98, %v459, 0
    %463 = vmatpush.bf16.msra.mxu0 0
    %464 = vmatpush.bf16.msra.mxu0 0
    %465 = vmatpush.bf16.msra.mxu0 0
    %466 = vmatpush.bf16.msra.mxu0 0
    %467 = vmatpush.bf16.msra.mxu0 0
    %468 = vmatpush.bf16.msra.mxu0 0
    %469 = vmatpush.bf16.msra.mxu0 %v95
    %470 = vmatpush.bf16.msra.mxu0 %v94
    %471 = vmatmul.bf16.gmra.mxu0 %v461
    %v472 = vpop.f32.mrf.mxu0
    %v473 = vadd.f32 0.0, %v472
    %v474 = vpop.f32.mrf.mxu0
    %475 = vdwg.mxu0
    %v476 = vadd.f32 %v84, %v473
    %v477 = vtanh.pop %v476
    %v479 = vrot.slane %v456, 4
    %v481 = vadd.f32 %v477, %v479
    %v482 = vsel %vm118, %v481, 0.0
    %v483 = vrot.slane %v482, 4
    %v484 = vadd.f32 %v482, %v483
    %v485 = vrot.slane %v484, 2
    %v486 = vadd.f32 %v484, %v485
    %v487 = vrot.slane %v486, 1
    %v488 = vadd.f32 %v486, %v487
    %v489 = vmul.f32 %v488, 0.25
    %v490 = vsub.f32 %v481, %v489
    %v491 = vmul.f32 %v490, %v490
    %v492 = vsel %vm118, %v491, 0.0
    %v493 = vrot.slane %v492, 4
    %v494 = vadd.f32 %v492, %v493
    %v495 = vrot.slane %v494, 2
    %v496 = vadd.f32 %v494, %v495
    %v497 = vrot.slane %v496, 1
    %v498 = vadd.f32 %v496, %v497
    %v499 = vmul.f32 %v498, 0.25
    %v500 = vmul.f32 %v33, %v490
    %v501 = vadd.f32 %v499, 1e-05
    %v502 = vrsqrt.pop %v501
    %v503 = vmul.f32 %v502, %v501
    %v504 = vmul.f32 %v503, %v502
    %v505 = vmul.f32 0.5, %v504
    %v506 = vsub.f32 1.5, %v505
    %v507 = vmul.f32 %v502, %v506
    %vm508 = vweird.f32 %v501
    %vm509 = vweird.f32 %v502
    %vm510 = vmor %vm508, %vm509
    %v511 = vsel %vm510, %v502, %v507
    %v512 = vmul.f32 %v500, %v511
    %v513 = vadd.f32 %v512, %v34
    %v514 = vpack.c.bf16 %v513, %v513
    %v516 = vsel %vm98, %v514, 0
    %518 = vmatpush.bf16.msra.mxu0 0
    %519 = vmatpush.bf16.msra.mxu0 0
    %520 = vmatpush.bf16.msra.mxu0 0
    %521 = vmatpush.bf16.msra.mxu0 0
    %522 = vmatpush.bf16.msra.mxu0 0
    %523 = vmatpush.bf16.msra.mxu0 0
    %524 = vmatpush.bf16.msra.mxu0 %v95
    %525 = vmatpush.bf16.msra.mxu0 %v94
    %526 = vmatmul.bf16.gmra.mxu0 %v516
    %v527 = vpop.f32.mrf.mxu0
    %v528 = vadd.f32 0.0, %v527
    %v529 = vpop.f32.mrf.mxu0
    %530 = vdwg.mxu0
    %v532 = vrot.slane %v528, 4
    %v534 = vadd.f32 %v84, %v532
    %v535 = vtanh.pop %v534
    %v537 = vrot.slane %v513, 4
    %v539 = vadd.f32 %v535, %v537
    %v541 = vrot.slane %v539, 4
    %v543 = vsel %vm118, %v541, 0.0
    %v544 = vrot.slane %v543, 4
    %v545 = vadd.f32 %v543, %v544
    %v546 = vrot.slane %v545, 2
    %v547 = vadd.f32 %v545, %v546
    %v548 = vrot.slane %v547, 1
    %v549 = vadd.f32 %v547, %v548
    %v550 = vmul.f32 %v549, 0.25
    %v551 = vsub.f32 %v539, %v550
    %v552 = vmul.f32 %v551, %v551
    %v554 = vrot.slane %v552, 4
    %v556 = vsel %vm118, %v554, 0.0
    %v557 = vrot.slane %v556, 4
    %v558 = vadd.f32 %v556, %v557
    %v559 = vrot.slane %v558, 2
    %v560 = vadd.f32 %v558, %v559
    %v561 = vrot.slane %v560, 1
    %v562 = vadd.f32 %v560, %v561
    %v563 = vmul.f32 %v562, 0.25
    %v564 = vmul.f32 %v33, %v551
    %v565 = vadd.f32 %v563, 1e-05
    %v566 = vrsqrt.pop %v565
    %v567 = vmul.f32 %v566, %v565
    %v568 = vmul.f32 %v567, %v566
    %v569 = vmul.f32 0.5, %v568
    %v570 = vsub.f32 1.5, %v569
    %v571 = vmul.f32 %v566, %v570
    %vm572 = vweird.f32 %v565
    %vm573 = vweird.f32 %v566
    %vm574 = vmor %vm572, %vm573
    %v575 = vsel %vm574, %v566, %v571
    %v576 = vmul.f32 %v564, %v575
    %v577 = vadd.f32 %v576, %v34
    %v578 = vlaneseq
    %v579 = vand.u32 %v578, 127
    %v580 = vlaneseq
    %v581 = vshrl.u32 %v580, 7
    %vm582 = vcmp.ge.s32.totalorder %v579, 1
    %vm583 = vcmp.lt.s32.totalorder %v579, 4
    %vm584 = vmand %vm582, %vm583
    %vm585 = vcmp.ge.s32.totalorder %v581, 0
    %vm586 = vcmp.lt.s32.totalorder %v581, 4
    %vm587 = vmand %vm585, %vm586
    %vm588 = vmand %vm584, %vm587
    %vm589 = vcmp.ge.s32.totalorder %v579, 4
    %vm590 = vcmp.lt.s32.totalorder %v579, 9
    %vm591 = vmand %vm589, %vm590
    %vm592 = vcmp.ge.s32.totalorder %v581, 4
    %vm593 = vcmp.lt.s32.totalorder %v581, 8
    %vm594 = vmand %vm592, %vm593
    %vm595 = vmand %vm591, %vm594
    %vm596 = vmor %vm588, %vm595
    %vm597 = vmor %vm584, %vm591
    %v599 = vrot.slane %v577, 4
    %600 = vrot.lane.b32.xlu0 %v599, 16
    %v601 = vpop.permute.xlu0 %600
    %v603 = vsel %vm60, 0.0, %v601
    %v604 = vpack.c.bf16 %v603, %v603
    %v611 = vunpack.c.l.b16 %v22
    %v612 = vunpack.c.l.b16 %v23
    %v613 = vunpack.c.l.b16 %v24
    %v614 = vunpack.c.l.b16 %v25
    %v615 = vunpack.c.l.b16 %v26
    %v616 = vunpack.c.l.b16 %v27
    %v617 = vpack.c.b16 %v612, %v611
    %v618 = vpack.c.b16 %v614, %v613
    %v619 = vpack.c.b16 %v616, %v615
    %vm623 = vcmask 392192
    %v625 = vsel %vm623, %v604, 0
    %627 = vmatpush.bf16.msra.mxu0 0
    %628 = vmatpush.bf16.msra.mxu0 0
    %629 = vmatpush.bf16.msra.mxu0 0
    %630 = vmatpush.bf16.msra.mxu0 0
    %631 = vmatpush.bf16.msra.mxu0 0
    %632 = vmatpush.bf16.msra.mxu0 %v619
    %633 = vmatpush.bf16.msra.mxu0 %v618
    %634 = vmatpush.bf16.msra.mxu0 %v617
    %635 = vmatmul.bf16.gmra.mxu0 %v625
    %v636 = vpop.f32.mrf.mxu0
    %v637 = vadd.f32 0.0, %v636
    %v638 = vpop.f32.mrf.mxu0
    %639 = vdwg.mxu0
    %v640 = vadd.f32 %v637, %v35
    %v641 = vtanh.pop %v640
    %v642 = vpack.c.bf16 %v641, %v641
    %v647 = vunpack.c.l.b16 %v28
    %v648 = vunpack.c.l.b16 %v29
    %v649 = vunpack.c.l.b16 %v30
    %v650 = vunpack.c.l.b16 %v31
    %v651 = vpack.c.b16 %v648, %v647
    %v652 = vpack.c.b16 %v650, %v649
    %v656 = vsel %vm98, %v642, 0
    %658 = vmatpush.bf16.msra.mxu0 0
    %659 = vmatpush.bf16.msra.mxu0 0
    %660 = vmatpush.bf16.msra.mxu0 0
    %661 = vmatpush.bf16.msra.mxu0 0
    %662 = vmatpush.bf16.msra.mxu0 0
    %663 = vmatpush.bf16.msra.mxu0 0
    %664 = vmatpush.bf16.msra.mxu0 %v652
    %665 = vmatpush.bf16.msra.mxu0 %v651
    %666 = vmatmul.bf16.gmra.mxu0 %v656
    %v667 = vpop.f32.mrf.mxu0
    %v668 = vadd.f32 0.0, %v667
    %v669 = vpop.f32.mrf.mxu0
    %670 = vdwg.mxu0
    %672 = vrot.lane.b32.xlu0 %v668, 32
    %v673 = vpop.permute.xlu0 %672
    %v675 = vadd.f32 %v637, %v673
    %677 = vrot.lane.b32.xlu0 %v38, 32
    %v678 = vpop.permute.xlu0 %677
    %v680 = vadd.f32 %v675, %v678
    %v682 = vadd.f32 %v641, %v599
    %v683 = vsel %vm118, %v682, 0.0
    %v684 = vrot.slane %v683, 4
    %v685 = vadd.f32 %v683, %v684
    %v686 = vrot.slane %v685, 2
    %v687 = vadd.f32 %v685, %v686
    %v688 = vrot.slane %v687, 1
    %v689 = vadd.f32 %v687, %v688
    %v690 = vmul.f32 %v689, 0.25
    %v691 = vsub.f32 %v682, %v690
    %v692 = vmul.f32 %v691, %v691
    %v693 = vsel %vm118, %v692, 0.0
    %v694 = vrot.slane %v693, 4
    %v695 = vadd.f32 %v693, %v694
    %v696 = vrot.slane %v695, 2
    %v697 = vadd.f32 %v695, %v696
    %v698 = vrot.slane %v697, 1
    %v699 = vadd.f32 %v697, %v698
    %v700 = vmul.f32 %v699, 0.25
    %v701 = vmul.f32 %v36, %v691
    %v702 = vadd.f32 %v700, 1e-05
    %v703 = vrsqrt.pop %v702
    %v704 = vmul.f32 %v703, %v702
    %v705 = vmul.f32 %v704, %v703
    %v706 = vmul.f32 0.5, %v705
    %v707 = vsub.f32 1.5, %v706
    %v708 = vmul.f32 %v703, %v707
    %vm709 = vweird.f32 %v702
    %vm710 = vweird.f32 %v703
    %vm711 = vmor %vm709, %vm710
    %v712 = vsel %vm711, %v703, %v708
    %v713 = vmul.f32 %v701, %v712
    %v714 = vadd.f32 %v713, %v37
    %v716 = vrot.slane %v680, 4
    %vm718 = vcmask 1043456
    %v719 = vsel %vm718, %v680, %v716
    %721 = vrot.lane.b32.xlu0 %v719, 96
    %v722 = vpop.permute.xlu0 %721
    %v724 = vsel %vm596, %v722, -inf
    %v725 = vsel %vm60, %v724, -inf
    %726 = vmax.xlane.f32.xlu0 %v725
    %v727 = vpop.xlane.xlu0 %726
    %vm728 = vcmp.eq.f32.partialorder %v724, %v727
    %v729 = vsel %vm728, %v579, 16
    %v730 = vsel %vm60, %v729, 2147483647
    %v731 = vand.u32 %v730, 65535
    %v732 = vshra.s32 %v730, 16
    %v733 = vcvt.s32.f32 %v731
    %v734 = vcvt.s32.f32 %v732
    %735 = vmin.xlane.f32.xlu0 %v734
    %v736 = vpop.xlane.xlu0 %735
    %vm737 = vcmp.eq.f32.partialorder %v734, %v736
    %v738 = vsel %vm737, %v733, inf
    %739 = vmin.xlane.f32.xlu0 %v738
    %v740 = vpop.xlane.xlu0 %739
    %v741 = vcvt.f32.s32 %v740
    %v742 = vcvt.f32.s32 %v736
    %v743 = vshll.u32 %v742, 16
    %v744 = vadd.s32 %v743, %v741
    %vm745 = vcmp.eq.s32.totalorder %v579, %v744
    %v746 = vsel %vm745, 1, 0
    %v747 = vcvt.s32.f32 %v746
    %v748 = vsel %vm60, %v747, -inf
    %v749 = vrot.slane %v748, 4
    %v750 = vmax.f32 %v748, %v749
    %v751 = vrot.slane %v750, 2
    %v752 = vmax.f32 %v750, %v751
    %v753 = vrot.slane %v752, 1
    %v754 = vmax.f32 %v752, %v753
    %755 = vrot.lane.b32.xlu0 %v680, 96
    %v756 = vpop.permute.xlu0 %755
    %v758 = vsel %vm597, %v754, %v756
    %760 = vrot.lane.b32.xlu0 %v714, 16
    %v761 = vpop.permute.xlu0 %760
    %v763 = vsel %vm60, %v758, %v761
    %v764 = vpack.c.bf16 %v763, %v763
    %v766 = vsel %vm623, %v764, 0
    %768 = vmatpush.bf16.msra.mxu0 0
    %769 = vmatpush.bf16.msra.mxu0 0
    %770 = vmatpush.bf16.msra.mxu0 0
    %771 = vmatpush.bf16.msra.mxu0 0
    %772 = vmatpush.bf16.msra.mxu0 0
    %773 = vmatpush.bf16.msra.mxu0 %v619
    %774 = vmatpush.bf16.msra.mxu0 %v618
    %775 = vmatpush.bf16.msra.mxu0 %v617
    %776 = vmatmul.bf16.gmra.mxu0 %v766
    %v777 = vpop.f32.mrf.mxu0
    %v778 = vadd.f32 0.0, %v777
    %v779 = vpop.f32.mrf.mxu0
    %780 = vdwg.mxu0
    %v781 = vadd.f32 %v778, %v35
    %v782 = vtanh.pop %v781
    %v783 = vpack.c.bf16 %v782, %v782
    %v785 = vsel %vm98, %v783, 0
    %787 = vmatpush.bf16.msra.mxu0 0
    %788 = vmatpush.bf16.msra.mxu0 0
    %789 = vmatpush.bf16.msra.mxu0 0
    %790 = vmatpush.bf16.msra.mxu0 0
    %791 = vmatpush.bf16.msra.mxu0 0
    %792 = vmatpush.bf16.msra.mxu0 0
    %793 = vmatpush.bf16.msra.mxu0 %v652
    %794 = vmatpush.bf16.msra.mxu0 %v651
    %795 = vmatmul.bf16.gmra.mxu0 %v785
    %v796 = vpop.f32.mrf.mxu0
    %v797 = vadd.f32 0.0, %v796
    %v798 = vpop.f32.mrf.mxu0
    %799 = vdwg.mxu0
    %801 = vrot.lane.b32.xlu0 %v797, 32
    %v802 = vpop.permute.xlu0 %801
    %v804 = vadd.f32 %v778, %v802
    %v805 = vadd.f32 %v804, %v678
    %v806 = vadd.f32 %v782, %v714
    %v807 = vsel %vm118, %v806, 0.0
    %v808 = vrot.slane %v807, 4
    %v809 = vadd.f32 %v807, %v808
    %v810 = vrot.slane %v809, 2
    %v811 = vadd.f32 %v809, %v810
    %v812 = vrot.slane %v811, 1
    %v813 = vadd.f32 %v811, %v812
    %v814 = vmul.f32 %v813, 0.25
    %v815 = vsub.f32 %v806, %v814
    %v816 = vmul.f32 %v815, %v815
    %v817 = vsel %vm118, %v816, 0.0
    %v818 = vrot.slane %v817, 4
    %v819 = vadd.f32 %v817, %v818
    %v820 = vrot.slane %v819, 2
    %v821 = vadd.f32 %v819, %v820
    %v822 = vrot.slane %v821, 1
    %v823 = vadd.f32 %v821, %v822
    %v824 = vmul.f32 %v823, 0.25
    %v825 = vmul.f32 %v36, %v815
    %v826 = vadd.f32 %v824, 1e-05
    %v827 = vrsqrt.pop %v826
    %v828 = vmul.f32 %v827, %v826
    %v829 = vmul.f32 %v828, %v827
    %v830 = vmul.f32 0.5, %v829
    %v831 = vsub.f32 1.5, %v830
    %v832 = vmul.f32 %v827, %v831
    %vm833 = vweird.f32 %v826
    %vm834 = vweird.f32 %v827
    %vm835 = vmor %vm833, %vm834
    %v836 = vsel %vm835, %v827, %v832
    %v837 = vmul.f32 %v825, %v836
    %v838 = vadd.f32 %v837, %v37
    %v840 = vrot.slane %v805, 4
    %v842 = vsel %vm718, %v805, %v840
    %844 = vrot.lane.b32.xlu0 %v842, 96
    %v845 = vpop.permute.xlu0 %844
    %v847 = vsel %vm596, %v845, -inf
    %v848 = vsel %vm60, %v847, -inf
    %849 = vmax.xlane.f32.xlu0 %v848
    %v850 = vpop.xlane.xlu0 %849
    %vm851 = vcmp.eq.f32.partialorder %v847, %v850
    %v852 = vsel %vm851, %v579, 16
    %v853 = vsel %vm60, %v852, 2147483647
    %v854 = vand.u32 %v853, 65535
    %v855 = vshra.s32 %v853, 16
    %v856 = vcvt.s32.f32 %v854
    %v857 = vcvt.s32.f32 %v855
    %858 = vmin.xlane.f32.xlu0 %v857
    %v859 = vpop.xlane.xlu0 %858
    %vm860 = vcmp.eq.f32.partialorder %v857, %v859
    %v861 = vsel %vm860, %v856, inf
    %862 = vmin.xlane.f32.xlu0 %v861
    %v863 = vpop.xlane.xlu0 %862
    %v864 = vcvt.f32.s32 %v863
    %v865 = vcvt.f32.s32 %v859
    %v866 = vshll.u32 %v865, 16
    %v867 = vadd.s32 %v866, %v864
    %vm868 = vcmp.eq.s32.totalorder %v579, %v867
    %v869 = vsel %vm868, 1, 0
    %v870 = vcvt.s32.f32 %v869
    %v871 = vsel %vm60, %v870, -inf
    %v872 = vrot.slane %v871, 4
    %v873 = vmax.f32 %v871, %v872
    %v874 = vrot.slane %v873, 2
    %v875 = vmax.f32 %v873, %v874
    %v876 = vrot.slane %v875, 1
    %v877 = vmax.f32 %v875, %v876
    %878 = vrot.lane.b32.xlu0 %v805, 96
    %v879 = vpop.permute.xlu0 %878
    %v881 = vsel %vm597, %v877, %v879
    %883 = vrot.lane.b32.xlu0 %v838, 16
    %v884 = vpop.permute.xlu0 %883
    %v886 = vsel %vm60, %v881, %v884
    %v887 = vpack.c.bf16 %v886, %v886
    %v889 = vsel %vm623, %v887, 0
    %891 = vmatpush.bf16.msra.mxu0 0
    %892 = vmatpush.bf16.msra.mxu0 0
    %893 = vmatpush.bf16.msra.mxu0 0
    %894 = vmatpush.bf16.msra.mxu0 0
    %895 = vmatpush.bf16.msra.mxu0 0
    %896 = vmatpush.bf16.msra.mxu0 %v619
    %897 = vmatpush.bf16.msra.mxu0 %v618
    %898 = vmatpush.bf16.msra.mxu0 %v617
    %899 = vmatmul.bf16.gmra.mxu0 %v889
    %v900 = vpop.f32.mrf.mxu0
    %v901 = vadd.f32 0.0, %v900
    %v902 = vpop.f32.mrf.mxu0
    %903 = vdwg.mxu0
    %v904 = vadd.f32 %v901, %v35
    %v905 = vtanh.pop %v904
    %v906 = vpack.c.bf16 %v905, %v905
    %v908 = vsel %vm98, %v906, 0
    %910 = vmatpush.bf16.msra.mxu0 0
    %911 = vmatpush.bf16.msra.mxu0 0
    %912 = vmatpush.bf16.msra.mxu0 0
    %913 = vmatpush.bf16.msra.mxu0 0
    %914 = vmatpush.bf16.msra.mxu0 0
    %915 = vmatpush.bf16.msra.mxu0 0
    %916 = vmatpush.bf16.msra.mxu0 %v652
    %917 = vmatpush.bf16.msra.mxu0 %v651
    %918 = vmatmul.bf16.gmra.mxu0 %v908
    %v919 = vpop.f32.mrf.mxu0
    %v920 = vadd.f32 0.0, %v919
    %v921 = vpop.f32.mrf.mxu0
    %922 = vdwg.mxu0
    %924 = vrot.lane.b32.xlu0 %v920, 32
    %v925 = vpop.permute.xlu0 %924
    %v927 = vadd.f32 %v901, %v925
    %v928 = vadd.f32 %v927, %v678
    %v929 = vadd.f32 %v905, %v838
    %v930 = vsel %vm118, %v929, 0.0
    %v931 = vrot.slane %v930, 4
    %v932 = vadd.f32 %v930, %v931
    %v933 = vrot.slane %v932, 2
    %v934 = vadd.f32 %v932, %v933
    %v935 = vrot.slane %v934, 1
    %v936 = vadd.f32 %v934, %v935
    %v937 = vmul.f32 %v936, 0.25
    %v938 = vsub.f32 %v929, %v937
    %v939 = vmul.f32 %v938, %v938
    %v940 = vsel %vm118, %v939, 0.0
    %v941 = vrot.slane %v940, 4
    %v942 = vadd.f32 %v940, %v941
    %v943 = vrot.slane %v942, 2
    %v944 = vadd.f32 %v942, %v943
    %v945 = vrot.slane %v944, 1
    %v946 = vadd.f32 %v944, %v945
    %v947 = vmul.f32 %v946, 0.25
    %v948 = vmul.f32 %v36, %v938
    %v949 = vadd.f32 %v947, 1e-05
    %v950 = vrsqrt.pop %v949
    %v951 = vmul.f32 %v950, %v949
    %v952 = vmul.f32 %v951, %v950
    %v953 = vmul.f32 0.5, %v952
    %v954 = vsub.f32 1.5, %v953
    %v955 = vmul.f32 %v950, %v954
    %vm956 = vweird.f32 %v949
    %vm957 = vweird.f32 %v950
    %vm958 = vmor %vm956, %vm957
    %v959 = vsel %vm958, %v950, %v955
    %v960 = vmul.f32 %v948, %v959
    %v961 = vadd.f32 %v960, %v37
    %v963 = vrot.slane %v928, 4
    %v965 = vsel %vm718, %v928, %v963
    %967 = vrot.lane.b32.xlu0 %v965, 96
    %v968 = vpop.permute.xlu0 %967
    %v970 = vsel %vm596, %v968, -inf
    %v971 = vsel %vm60, %v970, -inf
    %972 = vmax.xlane.f32.xlu0 %v971
    %v973 = vpop.xlane.xlu0 %972
    %vm974 = vcmp.eq.f32.partialorder %v970, %v973
    %v975 = vsel %vm974, %v579, 16
    %v976 = vsel %vm60, %v975, 2147483647
    %v977 = vand.u32 %v976, 65535
    %v978 = vshra.s32 %v976, 16
    %v979 = vcvt.s32.f32 %v977
    %v980 = vcvt.s32.f32 %v978
    %981 = vmin.xlane.f32.xlu0 %v980
    %v982 = vpop.xlane.xlu0 %981
    %vm983 = vcmp.eq.f32.partialorder %v980, %v982
    %v984 = vsel %vm983, %v979, inf
    %985 = vmin.xlane.f32.xlu0 %v984
    %v986 = vpop.xlane.xlu0 %985
    %v987 = vcvt.f32.s32 %v986
    %v988 = vcvt.f32.s32 %v982
    %v989 = vshll.u32 %v988, 16
    %v990 = vadd.s32 %v989, %v987
    %vm991 = vcmp.eq.s32.totalorder %v579, %v990
    %v992 = vsel %vm991, 1, 0
    %v993 = vcvt.s32.f32 %v992
    %v994 = vsel %vm60, %v993, -inf
    %v995 = vrot.slane %v994, 4
    %v996 = vmax.f32 %v994, %v995
    %v997 = vrot.slane %v996, 2
    %v998 = vmax.f32 %v996, %v997
    %v999 = vrot.slane %v998, 1
    %v1000 = vmax.f32 %v998, %v999
    %1001 = vrot.lane.b32.xlu0 %v928, 96
    %v1002 = vpop.permute.xlu0 %1001
    %v1004 = vsel %vm597, %v1000, %v1002
    %1006 = vrot.lane.b32.xlu0 %v961, 16
    %v1007 = vpop.permute.xlu0 %1006
    %v1009 = vsel %vm60, %v1004, %v1007
    %v1010 = vpack.c.bf16 %v1009, %v1009
    %v1012 = vsel %vm623, %v1010, 0
    %1014 = vmatpush.bf16.msra.mxu0 0
    %1015 = vmatpush.bf16.msra.mxu0 0
    %1016 = vmatpush.bf16.msra.mxu0 0
    %1017 = vmatpush.bf16.msra.mxu0 0
    %1018 = vmatpush.bf16.msra.mxu0 0
    %1019 = vmatpush.bf16.msra.mxu0 %v619
    %1020 = vmatpush.bf16.msra.mxu0 %v618
    %1021 = vmatpush.bf16.msra.mxu0 %v617
    %1022 = vmatmul.bf16.gmra.mxu0 %v1012
    %v1023 = vpop.f32.mrf.mxu0
    %v1024 = vadd.f32 0.0, %v1023
    %v1025 = vpop.f32.mrf.mxu0
    %1026 = vdwg.mxu0
    %v1027 = vadd.f32 %v1024, %v35
    %v1028 = vtanh.pop %v1027
    %v1029 = vpack.c.bf16 %v1028, %v1028
    %v1031 = vsel %vm98, %v1029, 0
    %1033 = vmatpush.bf16.msra.mxu0 0
    %1034 = vmatpush.bf16.msra.mxu0 0
    %1035 = vmatpush.bf16.msra.mxu0 0
    %1036 = vmatpush.bf16.msra.mxu0 0
    %1037 = vmatpush.bf16.msra.mxu0 0
    %1038 = vmatpush.bf16.msra.mxu0 0
    %1039 = vmatpush.bf16.msra.mxu0 %v652
    %1040 = vmatpush.bf16.msra.mxu0 %v651
    %1041 = vmatmul.bf16.gmra.mxu0 %v1031
    %v1042 = vpop.f32.mrf.mxu0
    %v1043 = vadd.f32 0.0, %v1042
    %v1044 = vpop.f32.mrf.mxu0
    %1045 = vdwg.mxu0
    %1047 = vrot.lane.b32.xlu0 %v1043, 32
    %v1048 = vpop.permute.xlu0 %1047
    %v1050 = vadd.f32 %v1024, %v1048
    %v1051 = vadd.f32 %v1050, %v678
    %v1052 = vadd.f32 %v1028, %v961
    %v1053 = vsel %vm118, %v1052, 0.0
    %v1054 = vrot.slane %v1053, 4
    %v1055 = vadd.f32 %v1053, %v1054
    %v1056 = vrot.slane %v1055, 2
    %v1057 = vadd.f32 %v1055, %v1056
    %v1058 = vrot.slane %v1057, 1
    %v1059 = vadd.f32 %v1057, %v1058
    %v1060 = vmul.f32 %v1059, 0.25
    %v1061 = vsub.f32 %v1052, %v1060
    %v1062 = vmul.f32 %v1061, %v1061
    %v1063 = vsel %vm118, %v1062, 0.0
    %v1064 = vrot.slane %v1063, 4
    %v1065 = vadd.f32 %v1063, %v1064
    %v1066 = vrot.slane %v1065, 2
    %v1067 = vadd.f32 %v1065, %v1066
    %v1068 = vrot.slane %v1067, 1
    %v1069 = vadd.f32 %v1067, %v1068
    %v1070 = vmul.f32 %v1069, 0.25
    %v1071 = vmul.f32 %v36, %v1061
    %v1072 = vadd.f32 %v1070, 1e-05
    %v1073 = vrsqrt.pop %v1072
    %v1074 = vmul.f32 %v1073, %v1072
    %v1075 = vmul.f32 %v1074, %v1073
    %v1076 = vmul.f32 0.5, %v1075
    %v1077 = vsub.f32 1.5, %v1076
    %v1078 = vmul.f32 %v1073, %v1077
    %vm1079 = vweird.f32 %v1072
    %vm1080 = vweird.f32 %v1073
    %vm1081 = vmor %vm1079, %vm1080
    %v1082 = vsel %vm1081, %v1073, %v1078
    %v1083 = vmul.f32 %v1071, %v1082
    %v1084 = vadd.f32 %v1083, %v37
    %v1086 = vrot.slane %v1051, 4
    %v1088 = vsel %vm718, %v1051, %v1086
    %1090 = vrot.lane.b32.xlu0 %v1088, 96
    %v1091 = vpop.permute.xlu0 %1090
    %v1093 = vsel %vm596, %v1091, -inf
    %v1094 = vsel %vm60, %v1093, -inf
    %1095 = vmax.xlane.f32.xlu0 %v1094
    %v1096 = vpop.xlane.xlu0 %1095
    %vm1097 = vcmp.eq.f32.partialorder %v1093, %v1096
    %v1098 = vsel %vm1097, %v579, 16
    %v1099 = vsel %vm60, %v1098, 2147483647
    %v1100 = vand.u32 %v1099, 65535
    %v1101 = vshra.s32 %v1099, 16
    %v1102 = vcvt.s32.f32 %v1100
    %v1103 = vcvt.s32.f32 %v1101
    %1104 = vmin.xlane.f32.xlu0 %v1103
    %v1105 = vpop.xlane.xlu0 %1104
    %vm1106 = vcmp.eq.f32.partialorder %v1103, %v1105
    %v1107 = vsel %vm1106, %v1102, inf
    %1108 = vmin.xlane.f32.xlu0 %v1107
    %v1109 = vpop.xlane.xlu0 %1108
    %v1110 = vcvt.f32.s32 %v1109
    %v1111 = vcvt.f32.s32 %v1105
    %v1112 = vshll.u32 %v1111, 16
    %v1113 = vadd.s32 %v1112, %v1110
    %vm1114 = vcmp.eq.s32.totalorder %v579, %v1113
    %v1115 = vsel %vm1114, 1, 0
    %v1116 = vcvt.s32.f32 %v1115
    %v1117 = vsel %vm60, %v1116, -inf
    %v1118 = vrot.slane %v1117, 4
    %v1119 = vmax.f32 %v1117, %v1118
    %v1120 = vrot.slane %v1119, 2
    %v1121 = vmax.f32 %v1119, %v1120
    %v1122 = vrot.slane %v1121, 1
    %v1123 = vmax.f32 %v1121, %v1122
    %1124 = vrot.lane.b32.xlu0 %v1051, 96
    %v1125 = vpop.permute.xlu0 %1124
    %v1127 = vsel %vm597, %v1123, %v1125
    %1129 = vrot.lane.b32.xlu0 %v1084, 16
    %v1130 = vpop.permute.xlu0 %1129
    %v1132 = vsel %vm60, %v1127, %v1130
    %v1133 = vpack.c.bf16 %v1132, %v1132
    %v1135 = vsel %vm623, %v1133, 0
    %1137 = vmatpush.bf16.msra.mxu0 0
    %1138 = vmatpush.bf16.msra.mxu0 0
    %1139 = vmatpush.bf16.msra.mxu0 0
    %1140 = vmatpush.bf16.msra.mxu0 0
    %1141 = vmatpush.bf16.msra.mxu0 0
    %1142 = vmatpush.bf16.msra.mxu0 %v619
    %1143 = vmatpush.bf16.msra.mxu0 %v618
    %1144 = vmatpush.bf16.msra.mxu0 %v617
    %1145 = vmatmul.bf16.gmra.mxu0 %v1135
    %v1146 = vpop.f32.mrf.mxu0
    %v1147 = vadd.f32 0.0, %v1146
    %v1148 = vpop.f32.mrf.mxu0
    %1149 = vdwg.mxu0
    %v1150 = vadd.f32 %v1147, %v35
    %v1151 = vtanh.pop %v1150
    %v1152 = vpack.c.bf16 %v1151, %v1151
    %v1154 = vsel %vm98, %v1152, 0
    %1156 = vmatpush.bf16.msra.mxu0 0
    %1157 = vmatpush.bf16.msra.mxu0 0
    %1158 = vmatpush.bf16.msra.mxu0 0
    %1159 = vmatpush.bf16.msra.mxu0 0
    %1160 = vmatpush.bf16.msra.mxu0 0
    %1161 = vmatpush.bf16.msra.mxu0 0
    %1162 = vmatpush.bf16.msra.mxu0 %v652
    %1163 = vmatpush.bf16.msra.mxu0 %v651
    %1164 = vmatmul.bf16.gmra.mxu0 %v1154
    %v1165 = vpop.f32.mrf.mxu0
    %v1166 = vadd.f32 0.0, %v1165
    %v1167 = vpop.f32.mrf.mxu0
    %1168 = vdwg.mxu0
    %1170 = vrot.lane.b32.xlu0 %v1166, 32
    %v1171 = vpop.permute.xlu0 %1170
    %v1173 = vadd.f32 %v1147, %v1171
    %v1174 = vadd.f32 %v1173, %v678
    %v1175 = vadd.f32 %v1151, %v1084
    %v1176 = vsel %vm118, %v1175, 0.0
    %v1177 = vrot.slane %v1176, 4
    %v1178 = vadd.f32 %v1176, %v1177
    %v1179 = vrot.slane %v1178, 2
    %v1180 = vadd.f32 %v1178, %v1179
    %v1181 = vrot.slane %v1180, 1
    %v1182 = vadd.f32 %v1180, %v1181
    %v1183 = vmul.f32 %v1182, 0.25
    %v1184 = vsub.f32 %v1175, %v1183
    %v1185 = vmul.f32 %v1184, %v1184
    %v1186 = vsel %vm118, %v1185, 0.0
    %v1187 = vrot.slane %v1186, 4
    %v1188 = vadd.f32 %v1186, %v1187
    %v1189 = vrot.slane %v1188, 2
    %v1190 = vadd.f32 %v1188, %v1189
    %v1191 = vrot.slane %v1190, 1
    %v1192 = vadd.f32 %v1190, %v1191
    %v1193 = vmul.f32 %v1192, 0.25
    %v1194 = vmul.f32 %v36, %v1184
    %v1195 = vadd.f32 %v1193, 1e-05
    %v1196 = vrsqrt.pop %v1195
    %v1197 = vmul.f32 %v1196, %v1195
    %v1198 = vmul.f32 %v1197, %v1196
    %v1199 = vmul.f32 0.5, %v1198
    %v1200 = vsub.f32 1.5, %v1199
    %v1201 = vmul.f32 %v1196, %v1200
    %vm1202 = vweird.f32 %v1195
    %vm1203 = vweird.f32 %v1196
    %vm1204 = vmor %vm1202, %vm1203
    %v1205 = vsel %vm1204, %v1196, %v1201
    %v1206 = vmul.f32 %v1194, %v1205
    %v1207 = vadd.f32 %v1206, %v37
    %v1209 = vrot.slane %v1174, 4
    %v1211 = vsel %vm718, %v1174, %v1209
    %1213 = vrot.lane.b32.xlu0 %v1211, 96
    %v1214 = vpop.permute.xlu0 %1213
    %v1216 = vsel %vm596, %v1214, -inf
    %v1217 = vsel %vm60, %v1216, -inf
    %1218 = vmax.xlane.f32.xlu0 %v1217
    %v1219 = vpop.xlane.xlu0 %1218
    %vm1220 = vcmp.eq.f32.partialorder %v1216, %v1219
    %v1221 = vsel %vm1220, %v579, 16
    %v1222 = vsel %vm60, %v1221, 2147483647
    %v1223 = vand.u32 %v1222, 65535
    %v1224 = vshra.s32 %v1222, 16
    %v1225 = vcvt.s32.f32 %v1223
    %v1226 = vcvt.s32.f32 %v1224
    %1227 = vmin.xlane.f32.xlu0 %v1226
    %v1228 = vpop.xlane.xlu0 %1227
    %vm1229 = vcmp.eq.f32.partialorder %v1226, %v1228
    %v1230 = vsel %vm1229, %v1225, inf
    %1231 = vmin.xlane.f32.xlu0 %v1230
    %v1232 = vpop.xlane.xlu0 %1231
    %v1233 = vcvt.f32.s32 %v1232
    %v1234 = vcvt.f32.s32 %v1228
    %v1235 = vshll.u32 %v1234, 16
    %v1236 = vadd.s32 %v1235, %v1233
    %vm1237 = vcmp.eq.s32.totalorder %v579, %v1236
    %v1238 = vsel %vm1237, 1, 0
    %v1239 = vcvt.s32.f32 %v1238
    %v1240 = vsel %vm60, %v1239, -inf
    %v1241 = vrot.slane %v1240, 4
    %v1242 = vmax.f32 %v1240, %v1241
    %v1243 = vrot.slane %v1242, 2
    %v1244 = vmax.f32 %v1242, %v1243
    %v1245 = vrot.slane %v1244, 1
    %v1246 = vmax.f32 %v1244, %v1245
    %1247 = vrot.lane.b32.xlu0 %v1174, 96
    %v1248 = vpop.permute.xlu0 %1247
    %v1250 = vsel %vm597, %v1246, %v1248
    %1252 = vrot.lane.b32.xlu0 %v1207, 16
    %v1253 = vpop.permute.xlu0 %1252
    %v1255 = vsel %vm60, %v1250, %v1253
    %v1256 = vpack.c.bf16 %v1255, %v1255
    %v1258 = vsel %vm623, %v1256, 0
    %1260 = vmatpush.bf16.msra.mxu0 0
    %1261 = vmatpush.bf16.msra.mxu0 0
    %1262 = vmatpush.bf16.msra.mxu0 0
    %1263 = vmatpush.bf16.msra.mxu0 0
    %1264 = vmatpush.bf16.msra.mxu0 0
    %1265 = vmatpush.bf16.msra.mxu0 %v619
    %1266 = vmatpush.bf16.msra.mxu0 %v618
    %1267 = vmatpush.bf16.msra.mxu0 %v617
    %1268 = vmatmul.bf16.gmra.mxu0 %v1258
    %v1269 = vpop.f32.mrf.mxu0
    %v1270 = vadd.f32 0.0, %v1269
    %v1271 = vpop.f32.mrf.mxu0
    %1272 = vdwg.mxu0
    %v1273 = vadd.f32 %v1270, %v35
    %v1274 = vtanh.pop %v1273
    %v1275 = vpack.c.bf16 %v1274, %v1274
    %v1277 = vsel %vm98, %v1275, 0
    %1279 = vmatpush.bf16.msra.mxu0 0
    %1280 = vmatpush.bf16.msra.mxu0 0
    %1281 = vmatpush.bf16.msra.mxu0 0
    %1282 = vmatpush.bf16.msra.mxu0 0
    %1283 = vmatpush.bf16.msra.mxu0 0
    %1284 = vmatpush.bf16.msra.mxu0 0
    %1285 = vmatpush.bf16.msra.mxu0 %v652
    %1286 = vmatpush.bf16.msra.mxu0 %v651
    %1287 = vmatmul.bf16.gmra.mxu0 %v1277
    %v1288 = vpop.f32.mrf.mxu0
    %v1289 = vadd.f32 0.0, %v1288
    %v1290 = vpop.f32.mrf.mxu0
    %1291 = vdwg.mxu0
    %1293 = vrot.lane.b32.xlu0 %v1289, 32
    %v1294 = vpop.permute.xlu0 %1293
    %v1296 = vadd.f32 %v1270, %v1294
    %v1297 = vadd.f32 %v1296, %v678
    %v1298 = vadd.f32 %v1274, %v1207
    %v1299 = vsel %vm118, %v1298, 0.0
    %v1300 = vrot.slane %v1299, 4
    %v1301 = vadd.f32 %v1299, %v1300
    %v1302 = vrot.slane %v1301, 2
    %v1303 = vadd.f32 %v1301, %v1302
    %v1304 = vrot.slane %v1303, 1
    %v1305 = vadd.f32 %v1303, %v1304
    %v1306 = vmul.f32 %v1305, 0.25
    %v1307 = vsub.f32 %v1298, %v1306
    %v1308 = vmul.f32 %v1307, %v1307
    %v1309 = vsel %vm118, %v1308, 0.0
    %v1310 = vrot.slane %v1309, 4
    %v1311 = vadd.f32 %v1309, %v1310
    %v1312 = vrot.slane %v1311, 2
    %v1313 = vadd.f32 %v1311, %v1312
    %v1314 = vrot.slane %v1313, 1
    %v1315 = vadd.f32 %v1313, %v1314
    %v1316 = vmul.f32 %v1315, 0.25
    %v1317 = vmul.f32 %v36, %v1307
    %v1318 = vadd.f32 %v1316, 1e-05
    %v1319 = vrsqrt.pop %v1318
    %v1320 = vmul.f32 %v1319, %v1318
    %v1321 = vmul.f32 %v1320, %v1319
    %v1322 = vmul.f32 0.5, %v1321
    %v1323 = vsub.f32 1.5, %v1322
    %v1324 = vmul.f32 %v1319, %v1323
    %vm1325 = vweird.f32 %v1318
    %vm1326 = vweird.f32 %v1319
    %vm1327 = vmor %vm1325, %vm1326
    %v1328 = vsel %vm1327, %v1319, %v1324
    %v1329 = vmul.f32 %v1317, %v1328
    %v1330 = vadd.f32 %v1329, %v37
    %v1332 = vrot.slane %v1297, 4
    %v1334 = vsel %vm718, %v1297, %v1332
    %1336 = vrot.lane.b32.xlu0 %v1334, 96
    %v1337 = vpop.permute.xlu0 %1336
    %v1339 = vsel %vm596, %v1337, -inf
    %v1340 = vsel %vm60, %v1339, -inf
    %1341 = vmax.xlane.f32.xlu0 %v1340
    %v1342 = vpop.xlane.xlu0 %1341
    %vm1343 = vcmp.eq.f32.partialorder %v1339, %v1342
    %v1344 = vsel %vm1343, %v579, 16
    %v1345 = vsel %vm60, %v1344, 2147483647
    %v1346 = vand.u32 %v1345, 65535
    %v1347 = vshra.s32 %v1345, 16
    %v1348 = vcvt.s32.f32 %v1346
    %v1349 = vcvt.s32.f32 %v1347
    %1350 = vmin.xlane.f32.xlu0 %v1349
    %v1351 = vpop.xlane.xlu0 %1350
    %vm1352 = vcmp.eq.f32.partialorder %v1349, %v1351
    %v1353 = vsel %vm1352, %v1348, inf
    %1354 = vmin.xlane.f32.xlu0 %v1353
    %v1355 = vpop.xlane.xlu0 %1354
    %v1356 = vcvt.f32.s32 %v1355
    %v1357 = vcvt.f32.s32 %v1351
    %v1358 = vshll.u32 %v1357, 16
    %v1359 = vadd.s32 %v1358, %v1356
    %vm1360 = vcmp.eq.s32.totalorder %v579, %v1359
    %v1361 = vsel %vm1360, 1, 0
    %v1362 = vcvt.s32.f32 %v1361
    %v1363 = vsel %vm60, %v1362, -inf
    %v1364 = vrot.slane %v1363, 4
    %v1365 = vmax.f32 %v1363, %v1364
    %v1366 = vrot.slane %v1365, 2
    %v1367 = vmax.f32 %v1365, %v1366
    %v1368 = vrot.slane %v1367, 1
    %v1369 = vmax.f32 %v1367, %v1368
    %1370 = vrot.lane.b32.xlu0 %v1297, 96
    %v1371 = vpop.permute.xlu0 %1370
    %v1373 = vsel %vm597, %v1369, %v1371
    %1375 = vrot.lane.b32.xlu0 %v1330, 16
    %v1376 = vpop.permute.xlu0 %1375
    %v1378 = vsel %vm60, %v1373, %v1376
    %v1379 = vpack.c.bf16 %v1378, %v1378
    %v1381 = vsel %vm623, %v1379, 0
    %1383 = vmatpush.bf16.msra.mxu0 0
    %1384 = vmatpush.bf16.msra.mxu0 0
    %1385 = vmatpush.bf16.msra.mxu0 0
    %1386 = vmatpush.bf16.msra.mxu0 0
    %1387 = vmatpush.bf16.msra.mxu0 0
    %1388 = vmatpush.bf16.msra.mxu0 %v619
    %1389 = vmatpush.bf16.msra.mxu0 %v618
    %1390 = vmatpush.bf16.msra.mxu0 %v617
    %1391 = vmatmul.bf16.gmra.mxu0 %v1381
    %v1392 = vpop.f32.mrf.mxu0
    %v1393 = vadd.f32 0.0, %v1392
    %v1394 = vpop.f32.mrf.mxu0
    %1395 = vdwg.mxu0
    %v1396 = vadd.f32 %v1393, %v35
    %v1397 = vtanh.pop %v1396
    %v1398 = vpack.c.bf16 %v1397, %v1397
    %v1400 = vsel %vm98, %v1398, 0
    %1402 = vmatpush.bf16.msra.mxu0 0
    %1403 = vmatpush.bf16.msra.mxu0 0
    %1404 = vmatpush.bf16.msra.mxu0 0
    %1405 = vmatpush.bf16.msra.mxu0 0
    %1406 = vmatpush.bf16.msra.mxu0 0
    %1407 = vmatpush.bf16.msra.mxu0 0
    %1408 = vmatpush.bf16.msra.mxu0 %v652
    %1409 = vmatpush.bf16.msra.mxu0 %v651
    %1410 = vmatmul.bf16.gmra.mxu0 %v1400
    %v1411 = vpop.f32.mrf.mxu0
    %v1412 = vadd.f32 0.0, %v1411
    %v1413 = vpop.f32.mrf.mxu0
    %1414 = vdwg.mxu0
    %1416 = vrot.lane.b32.xlu0 %v1412, 32
    %v1417 = vpop.permute.xlu0 %1416
    %v1419 = vadd.f32 %v1393, %v1417
    %v1420 = vadd.f32 %v1419, %v678
    %v1421 = vadd.f32 %v1397, %v1330
    %v1422 = vsel %vm118, %v1421, 0.0
    %v1423 = vrot.slane %v1422, 4
    %v1424 = vadd.f32 %v1422, %v1423
    %v1425 = vrot.slane %v1424, 2
    %v1426 = vadd.f32 %v1424, %v1425
    %v1427 = vrot.slane %v1426, 1
    %v1428 = vadd.f32 %v1426, %v1427
    %v1429 = vmul.f32 %v1428, 0.25
    %v1430 = vsub.f32 %v1421, %v1429
    %v1431 = vmul.f32 %v1430, %v1430
    %v1432 = vsel %vm118, %v1431, 0.0
    %v1433 = vrot.slane %v1432, 4
    %v1434 = vadd.f32 %v1432, %v1433
    %v1435 = vrot.slane %v1434, 2
    %v1436 = vadd.f32 %v1434, %v1435
    %v1437 = vrot.slane %v1436, 1
    %v1438 = vadd.f32 %v1436, %v1437
    %v1439 = vmul.f32 %v1438, 0.25
    %v1440 = vmul.f32 %v36, %v1430
    %v1441 = vadd.f32 %v1439, 1e-05
    %v1442 = vrsqrt.pop %v1441
    %v1443 = vmul.f32 %v1442, %v1441
    %v1444 = vmul.f32 %v1443, %v1442
    %v1445 = vmul.f32 0.5, %v1444
    %v1446 = vsub.f32 1.5, %v1445
    %v1447 = vmul.f32 %v1442, %v1446
    %vm1448 = vweird.f32 %v1441
    %vm1449 = vweird.f32 %v1442
    %vm1450 = vmor %vm1448, %vm1449
    %v1451 = vsel %vm1450, %v1442, %v1447
    %v1452 = vmul.f32 %v1440, %v1451
    %v1453 = vadd.f32 %v1452, %v37
    %v1455 = vrot.slane %v1420, 4
    %v1457 = vsel %vm718, %v1420, %v1455
    %1459 = vrot.lane.b32.xlu0 %v1457, 96
    %v1460 = vpop.permute.xlu0 %1459
    %v1462 = vsel %vm596, %v1460, -inf
    %v1463 = vsel %vm60, %v1462, -inf
    %1464 = vmax.xlane.f32.xlu0 %v1463
    %v1465 = vpop.xlane.xlu0 %1464
    %vm1466 = vcmp.eq.f32.partialorder %v1462, %v1465
    %v1467 = vsel %vm1466, %v579, 16
    %v1468 = vsel %vm60, %v1467, 2147483647
    %v1469 = vand.u32 %v1468, 65535
    %v1470 = vshra.s32 %v1468, 16
    %v1471 = vcvt.s32.f32 %v1469
    %v1472 = vcvt.s32.f32 %v1470
    %1473 = vmin.xlane.f32.xlu0 %v1472
    %v1474 = vpop.xlane.xlu0 %1473
    %vm1475 = vcmp.eq.f32.partialorder %v1472, %v1474
    %v1476 = vsel %vm1475, %v1471, inf
    %1477 = vmin.xlane.f32.xlu0 %v1476
    %v1478 = vpop.xlane.xlu0 %1477
    %v1479 = vcvt.f32.s32 %v1478
    %v1480 = vcvt.f32.s32 %v1474
    %v1481 = vshll.u32 %v1480, 16
    %v1482 = vadd.s32 %v1481, %v1479
    %vm1483 = vcmp.eq.s32.totalorder %v579, %v1482
    %v1484 = vsel %vm1483, 1, 0
    %v1485 = vcvt.s32.f32 %v1484
    %v1486 = vsel %vm60, %v1485, -inf
    %v1487 = vrot.slane %v1486, 4
    %v1488 = vmax.f32 %v1486, %v1487
    %v1489 = vrot.slane %v1488, 2
    %v1490 = vmax.f32 %v1488, %v1489
    %v1491 = vrot.slane %v1490, 1
    %v1492 = vmax.f32 %v1490, %v1491
    %1493 = vrot.lane.b32.xlu0 %v1420, 96
    %v1494 = vpop.permute.xlu0 %1493
    %v1496 = vsel %vm597, %v1492, %v1494
    %1498 = vrot.lane.b32.xlu0 %v1453, 16
    %v1499 = vpop.permute.xlu0 %1498
    %v1501 = vsel %vm60, %v1496, %v1499
    %v1502 = vpack.c.bf16 %v1501, %v1501
    %v1504 = vsel %vm623, %v1502, 0
    %1506 = vmatpush.bf16.msra.mxu0 0
    %1507 = vmatpush.bf16.msra.mxu0 0
    %1508 = vmatpush.bf16.msra.mxu0 0
    %1509 = vmatpush.bf16.msra.mxu0 0
    %1510 = vmatpush.bf16.msra.mxu0 0
    %1511 = vmatpush.bf16.msra.mxu0 %v619
    %1512 = vmatpush.bf16.msra.mxu0 %v618
    %1513 = vmatpush.bf16.msra.mxu0 %v617
    %1514 = vmatmul.bf16.gmra.mxu0 %v1504
    %v1515 = vpop.f32.mrf.mxu0
    %v1516 = vadd.f32 0.0, %v1515
    %v1517 = vpop.f32.mrf.mxu0
    %1518 = vdwg.mxu0
    %v1519 = vadd.f32 %v1516, %v35
    %v1520 = vtanh.pop %v1519
    %v1521 = vpack.c.bf16 %v1520, %v1520
    %v1523 = vsel %vm98, %v1521, 0
    %1525 = vmatpush.bf16.msra.mxu0 0
    %1526 = vmatpush.bf16.msra.mxu0 0
    %1527 = vmatpush.bf16.msra.mxu0 0
    %1528 = vmatpush.bf16.msra.mxu0 0
    %1529 = vmatpush.bf16.msra.mxu0 0
    %1530 = vmatpush.bf16.msra.mxu0 0
    %1531 = vmatpush.bf16.msra.mxu0 %v652
    %1532 = vmatpush.bf16.msra.mxu0 %v651
    %1533 = vmatmul.bf16.gmra.mxu0 %v1523
    %v1534 = vpop.f32.mrf.mxu0
    %v1535 = vadd.f32 0.0, %v1534
    %v1536 = vpop.f32.mrf.mxu0
    %1537 = vdwg.mxu0
    %1539 = vrot.lane.b32.xlu0 %v1535, 32
    %v1540 = vpop.permute.xlu0 %1539
    %v1542 = vadd.f32 %v1516, %v1540
    %v1543 = vadd.f32 %v1542, %v678
    %1544 = vrot.lane.b32.xlu0 %v805, 112
    %v1545 = vpop.permute.xlu0 %1544
    %1547 = vrot.lane.b32.xlu0 %v1051, 16
    %v1548 = vpop.permute.xlu0 %1547
    %1550 = vrot.lane.b32.xlu0 %v1174, 32
    %v1551 = vpop.permute.xlu0 %1550
    %1553 = vrot.lane.b32.xlu0 %v1297, 48
    %v1554 = vpop.permute.xlu0 %1553
    %1556 = vrot.lane.b32.xlu0 %v1420, 64
    %v1557 = vpop.permute.xlu0 %1556
    %1560 = vrot.lane.b32.xlu0 %v1543, 80
    %v1561 = vpop.permute.xlu0 %1560
    %v1563 = vsel %vm60, %v756, %v1545
    %v1564 = vsel %vm98, %v1563, %v928
    %v1565 = vsel %vm623, %v1564, %v1548
    %vm1566 = vcmask 523264
    %v1567 = vsel %vm1566, %v1565, %v1551
    %vm1568 = vcmask 654336
    %v1569 = vsel %vm1568, %v1567, %v1554
    %vm1570 = vcmask 785408
    %v1571 = vsel %vm1570, %v1569, %v1557
    %vm1572 = vcmask 916480
    %v1573 = vsel %vm1572, %v1571, %v1561
    %1574 = vst [vmem:[#allocation2] sm:$0xf] %v1573
    // Predicated region
    $region14: #{tpu_custom_call.1} parent=1 // pred_check
      _
    $region15: #{tpu_custom_call.1} parent=1 // pred_check_branch
      %1576 = sbr.rel (0) target = $region17
    $region16: #{tpu_custom_call.1} parent=1 // pred_region
      %1578 = vsyncadd [#allocation3], 0
      %s1580 = sshll.u32 [#allocation2], 4
      %s1581 = int_to_ptr.vmem [resolvable:$true] %s1580
      %s1582 = sshll.u32 %s3, 4
      %s1583 = int_to_ptr.hbm [resolvable:$true] %s1582
      %1585 = dma.vmem_to_hbm [thread:$0]  %s1581, 64, %s1583, [#allocation3]
    $region17: #{tpu_custom_call.1} parent=1 // pred_fallthru
      _
    // Predicated region
    $region18: #{tpu_custom_call.1} parent=1 // pred_check
      _
    $region19: #{tpu_custom_call.1} parent=1 // pred_check_branch
      %1587 = sbr.rel (0) target = $region21
    $region20: #{tpu_custom_call.1} parent=1 // pred_region
      %1589 = dma.done [#allocation3], 64
    $region21: #{tpu_custom_call.1} parent=1 // pred_fallthru
      _
    %1590 = vsyncpa [#allocation3], 1

</llo_original>
